<compile_context>
chip_gen: v7x
topology: tpu7x:2x2x1
jax: 0.10.0
libtpu: 0.0.40
codegen_flags: <defaults>
</compile_context>

<pallas_src>
import functools

import jax
import jax.numpy as jnp
from jax import lax
from jax.experimental import pallas as pl
from jax.experimental.pallas import tpu as pltpu


# ---------------------------------------------------------------------------
# Kernel
# ---------------------------------------------------------------------------
def _decoder_kernel(x_ref, w1_ref, b1_ref, w2_ref, b2_ref, w3_ref, b3_ref,
                    o_ref, *, compute_dtype, precision):
    """Fused 3-layer MLP on lane-packed rows: relu(relu(xW1+b1)W2+b2)W3+b3.

    x arrives straight from HBM in its original dtype; the cast to the matmul
    staging dtype happens here so no staging copy of x is ever materialized.
    """
    x = x_ref[...].astype(compute_dtype)
    h = jnp.dot(x, w1_ref[...], preferred_element_type=jnp.float32,
                precision=precision)
    h = jnp.maximum(h + b1_ref[...], 0.0)                     # f32 bias/ReLU
    h = jnp.dot(h.astype(compute_dtype), w2_ref[...],
                preferred_element_type=jnp.float32, precision=precision)
    h = jnp.maximum(h + b2_ref[...], 0.0)
    o = jnp.dot(h.astype(compute_dtype), w3_ref[...],
                preferred_element_type=jnp.float32, precision=precision)
    o_ref[...] = (o + b3_ref[...]).astype(o_ref.dtype)


# ---------------------------------------------------------------------------
# Helpers
# ---------------------------------------------------------------------------
def _round_up(a, b):
    return ((a + b - 1) // b) * b


def _device_kind():
    try:
        return jax.devices()[0].device_kind.lower()
    except Exception:  # pragma: no cover - no device info available
        return ""


def _mxu_k_width():
    """Native MXU contraction width: 128 on v5e and older, 256 on v6e/v7x."""
    kind = _device_kind()
    for tag in ("v2", "v3", "v4", "v5"):
        if tag in kind:
            return 128
    return 256


def _num_tensorcores():
    """v7x exposes two TensorCores per chip; older generations one."""
    return 2 if "v7" in _device_kind() else 1


def _pick_pack(in_dim):
    """Pack logical rows until the contraction dim fills the MXU width."""
    target = _mxu_k_width()
    if in_dim >= target:
        return 1
    return max(1, target // in_dim)


def _block_diag(w, pack):
    """(k, n) -> (pack*k, pack*n) block-diagonal with `pack` copies of w."""
    if pack == 1:
        return w
    k, n = w.shape
    eye = jnp.eye(pack, dtype=w.dtype)
    return (eye[:, None, :, None] * w[None, :, None, :]).reshape(
        pack * k, pack * n)


# ---------------------------------------------------------------------------
# Wrapper
# ---------------------------------------------------------------------------
def decoder_forward(feat, params, *, tile_m=16384,
                    compute_dtype=jnp.bfloat16):
    """feat: (..., in_dim).  Returns (..., out_dim) in feat.dtype.

    tile_m is in *logical* rows.  compute_dtype stages the matmul inputs
    (accumulation is always f32); compute_dtype=jnp.float32 reproduces the
    PyTorch module numerics (Precision.HIGHEST is used in that case).
    """
    w1, b1, w2, b2, w3, b3 = (params["w1"], params["b1"], params["w2"],
                              params["b2"], params["w3"], params["b3"])
    in_dim, mlp_width = w1.shape
    out_dim = w3.shape[1]

    lead_shape = feat.shape[:-1]
    x = feat.reshape(-1, in_dim)          # free (row-major) reshape
    m = x.shape[0]

    pack = _pick_pack(in_dim)

    # Pad only to the next multiple of `pack` (rare, at most pack-1 rows of
    # padding); grid-level raggedness is handled by Pallas OOB masking.
    rem = m % pack
    if rem:
        x = jnp.pad(x, ((0, pack - rem), (0, 0)))
    m_pad = m + (pack - rem) % pack
    mp_raw = m_pad // pack                # packed rows (exact)
    xp = x.reshape(mp_raw, pack * in_dim)  # free reshape, original dtype

    # ---- tile / grid heuristic -------------------------------------------
    tp_req = max(8, _round_up(max(1, tile_m // pack), 8))
    if mp_raw >= tp_req:
        tp = tp_req
    else:
        # Whole problem fits one requested tile: still give the pipeline (and,
        # on v7x, both TensorCores) a few steps, as long as every step keeps
        # >= 128 packed rows so the ~0.35us/step overhead stays amortised.
        target_steps = 4 * _num_tensorcores()
        steps = max(1, min(target_steps, mp_raw // 128))
        tp = _round_up(pl.cdiv(mp_raw, steps), 8)
    grid_m = pl.cdiv(mp_raw, tp)          # last block may be ragged (masked)

    # ---- block-diagonal packed weights (exact zeros off-diagonal) ---------
    w1p = _block_diag(w1, pack).astype(compute_dtype)
    w2p = _block_diag(w2, pack).astype(compute_dtype)
    w3p = _block_diag(w3, pack).astype(compute_dtype)
    b1p = jnp.tile(b1, pack).reshape(1, pack * mlp_width).astype(jnp.float32)
    b2p = jnp.tile(b2, pack).reshape(1, pack * mlp_width).astype(jnp.float32)
    b3p = jnp.tile(b3, pack).reshape(1, pack * out_dim).astype(jnp.float32)

    kin = pack * in_dim
    kh = pack * mlp_width
    ko = pack * out_dim

    precision = (lax.Precision.HIGHEST
                 if jnp.dtype(compute_dtype) == jnp.dtype(jnp.float32)
                 else None)
    kernel = functools.partial(_decoder_kernel,
                               compute_dtype=compute_dtype,
                               precision=precision)

    out = pl.pallas_call(
        kernel,
        out_shape=jax.ShapeDtypeStruct((mp_raw, ko), feat.dtype),
        grid_spec=pltpu.PrefetchScalarGridSpec(
            num_scalar_prefetch=0,
            grid=(grid_m,),
            in_specs=[
                pl.BlockSpec((tp, kin), lambda i: (i, 0)),    # packed x rows
                pl.BlockSpec((kin, kh), lambda i: (0, 0)),    # W1 (block-diag)
                pl.BlockSpec((1, kh), lambda i: (0, 0)),      # b1 (tiled)
                pl.BlockSpec((kh, kh), lambda i: (0, 0)),     # W2 (block-diag)
                pl.BlockSpec((1, kh), lambda i: (0, 0)),      # b2 (tiled)
                pl.BlockSpec((kh, ko), lambda i: (0, 0)),     # W3 (block-diag)
                pl.BlockSpec((1, ko), lambda i: (0, 0)),      # b3 (tiled)
            ],
            out_specs=pl.BlockSpec((tp, ko), lambda i: (i, 0)),
        ),
        compiler_params=pltpu.CompilerParams(
            dimension_semantics=("parallel",),
            vmem_limit_bytes=32 * 1024 * 1024),
    )(xp, w1p, b1p, w2p, b2p, w3p, b3p)

    out = out.reshape(m_pad, out_dim)[:m]
    return out.reshape(*lead_shape, out_dim)


# ---------------------------------------------------------------------------
# Params / reference
# ---------------------------------------------------------------------------
def init_decoder_params(key, c_dim, mlp_width, out_dim, dtype=jnp.float32):
    """Deterministic synthetic params (shapes mirror the PyTorch module)."""
    in_dim = c_dim * 2
    k = jax.random.split(key, 6)

    def uniform_fanin(kk, fan_in, shape):
        bound = 1.0 / jnp.sqrt(fan_in)
        return jax.random.uniform(kk, shape, dtype, minval=-bound, maxval=bound)

    return {
        # Stored as (in, out) so the kernel does x @ W (PyTorch does x @ W.T).
        "w1": uniform_fanin(k[0], in_dim, (in_dim, mlp_width)),
        "b1": uniform_fanin(k[1], in_dim, (mlp_width,)),
        "w2": uniform_fanin(k[2], mlp_width, (mlp_width, mlp_width)),
        "b2": uniform_fanin(k[3], mlp_width, (mlp_width,)),
        "w3": uniform_fanin(k[4], mlp_width, (mlp_width, out_dim)),
        "b3": uniform_fanin(k[5], mlp_width, (out_dim,)),
    }


def decoder_reference(feat, params, compute_dtype=jnp.float32, precision=None):
    """Plain-JAX reference (staged to compute_dtype exactly like the kernel)."""
    cd = compute_dtype
    h = jnp.dot(feat.astype(cd), params["w1"].astype(cd),
                preferred_element_type=jnp.float32, precision=precision)
    h = jnp.maximum(h + params["b1"].astype(jnp.float32), 0.0)
    h = jnp.dot(h.astype(cd), params["w2"].astype(cd),
                preferred_element_type=jnp.float32, precision=precision)
    h = jnp.maximum(h + params["b2"].astype(jnp.float32), 0.0)
    o = jnp.dot(h.astype(cd), params["w3"].astype(cd),
                preferred_element_type=jnp.float32, precision=precision)
    return (o + params["b3"].astype(jnp.float32)).astype(feat.dtype)


# ---------------------------------------------------------------------------
# Demo / self-test
# ---------------------------------------------------------------------------
if __name__ == "__main__":
    # model_params = {c_dim: 16, mlp_dim: 32, out_dim: 8}
    c_dim, mlp_width, out_dim = 16, 32, 8
    # 2002 rows: not a multiple of the packing factor (4 or 8) -> exercises
    # the tiny pack-pad path and the ragged last grid block (OOB masking).
    batch, n_points = 2, 1001

    key = jax.random.PRNGKey(0)
    kp, kx = jax.random.split(key)
    params = init_decoder_params(kp, c_dim, mlp_width, out_dim)
    feat = jax.random.normal(kx, (batch, n_points, c_dim * 2), jnp.float32)

    # Fast path (bf16-staged matmul inputs, f32 accumulation, f32 bias/ReLU).
    out = jax.block_until_ready(decoder_forward(feat, params))
    assert out.shape == (batch, n_points, out_dim)
    ref_bf16 = decoder_reference(feat, params, compute_dtype=jnp.bfloat16)
    assert jnp.allclose(out, ref_bf16, atol=5e-3, rtol=5e-3)

    # Exact-semantics path (f32 everywhere, HIGHEST matmul precision).
    out_f32 = jax.block_until_ready(
        decoder_forward(feat, params, compute_dtype=jnp.float32))
    ref_f32 = decoder_reference(feat, params, compute_dtype=jnp.float32,
                                precision=lax.Precision.HIGHEST)
    assert jnp.allclose(out_f32, ref_f32, atol=1e-4, rtol=1e-4)

    print("KERNEL_OK")
</pallas_src>

<mosaic_0001>
module attributes {stable_mosaic.version = 11 : i64} {
  func.func @_decoder_kernel(%arg0: i32, %arg1: memref<256x256xf32, #tpu.memory_space<vmem>>, %arg2: memref<256x256xbf16, #tpu.memory_space<vmem>>, %arg3: memref<1x256xf32, #tpu.memory_space<vmem>>, %arg4: memref<256x256xbf16, #tpu.memory_space<vmem>>, %arg5: memref<1x256xf32, #tpu.memory_space<vmem>>, %arg6: memref<256x64xbf16, #tpu.memory_space<vmem>>, %arg7: memref<1x64xf32, #tpu.memory_space<vmem>>, %arg8: memref<256x64xf32, #tpu.memory_space<vmem>>) attributes {dimension_semantics = [#tpu.dimension_semantics<parallel>], iteration_bounds = array<i64: 1>, scalar_prefetch = 0 : i64, scratch_operands = 0 : i64, tpu.core_type = #tpu.core_type<tc>, window_params = [{transform_indices = @transform_0, window_bounds = array<i64: 256, 256>}, {pipeline_mode = #tpu.pipeline_mode<synchronous>, transform_indices = @transform_1, window_bounds = array<i64: 256, 256>}, {pipeline_mode = #tpu.pipeline_mode<synchronous>, transform_indices = @transform_2, window_bounds = array<i64: 1, 256>}, {pipeline_mode = #tpu.pipeline_mode<synchronous>, transform_indices = @transform_3, window_bounds = array<i64: 256, 256>}, {pipeline_mode = #tpu.pipeline_mode<synchronous>, transform_indices = @transform_4, window_bounds = array<i64: 1, 256>}, {pipeline_mode = #tpu.pipeline_mode<synchronous>, transform_indices = @transform_5, window_bounds = array<i64: 256, 64>}, {pipeline_mode = #tpu.pipeline_mode<synchronous>, transform_indices = @transform_6, window_bounds = array<i64: 1, 64>}, {transform_indices = @transform_7, window_bounds = array<i64: 256, 64>}]} {
    %c0 = arith.constant 0 : index
    %c0_0 = arith.constant 0 : index
    %0 = vector.load %arg1[%c0, %c0_0] : memref<256x256xf32, #tpu.memory_space<vmem>>, vector<256x256xf32>
    %1 = arith.truncf %0 : vector<256x256xf32> to vector<256x256xbf16>
    %c0_1 = arith.constant 0 : index
    %c0_2 = arith.constant 0 : index
    %2 = vector.load %arg2[%c0_1, %c0_2] : memref<256x256xbf16, #tpu.memory_space<vmem>>, vector<256x256xbf16>
    %cst = arith.constant dense<0.000000e+00> : vector<256x256xf32>
    %3 = tpu.matmul %1, %2, %cst {dimension_numbers = #tpu.dot_dimension_numbers<[1], [0], [0], [1], [0, 0, 1, 1], [], []>} : vector<256x256xbf16>, vector<256x256xbf16>, vector<256x256xf32> -> vector<256x256xf32>
    %c0_3 = arith.constant 0 : index
    %c0_4 = arith.constant 0 : index
    %4 = vector.load %arg3[%c0_3, %c0_4] : memref<1x256xf32, #tpu.memory_space<vmem>>, vector<1x256xf32>
    %5 = vector.broadcast %4 : vector<1x256xf32> to vector<256x256xf32>
    %6 = arith.addf %3, %5 : vector<256x256xf32>
    %cst_5 = arith.constant 0.000000e+00 : f32
    %7 = vector.broadcast %cst_5 : f32 to vector<256x256xf32>
    %8 = arith.maximumf %6, %7 : vector<256x256xf32>
    %9 = arith.truncf %8 : vector<256x256xf32> to vector<256x256xbf16>
    %c0_6 = arith.constant 0 : index
    %c0_7 = arith.constant 0 : index
    %10 = vector.load %arg4[%c0_6, %c0_7] : memref<256x256xbf16, #tpu.memory_space<vmem>>, vector<256x256xbf16>
    %cst_8 = arith.constant dense<0.000000e+00> : vector<256x256xf32>
    %11 = tpu.matmul %9, %10, %cst_8 {dimension_numbers = #tpu.dot_dimension_numbers<[1], [0], [0], [1], [0, 0, 1, 1], [], []>} : vector<256x256xbf16>, vector<256x256xbf16>, vector<256x256xf32> -> vector<256x256xf32>
    %c0_9 = arith.constant 0 : index
    %c0_10 = arith.constant 0 : index
    %12 = vector.load %arg5[%c0_9, %c0_10] : memref<1x256xf32, #tpu.memory_space<vmem>>, vector<1x256xf32>
    %13 = vector.broadcast %12 : vector<1x256xf32> to vector<256x256xf32>
    %14 = arith.addf %11, %13 : vector<256x256xf32>
    %cst_11 = arith.constant 0.000000e+00 : f32
    %15 = vector.broadcast %cst_11 : f32 to vector<256x256xf32>
    %16 = arith.maximumf %14, %15 : vector<256x256xf32>
    %17 = arith.truncf %16 : vector<256x256xf32> to vector<256x256xbf16>
    %c0_12 = arith.constant 0 : index
    %c0_13 = arith.constant 0 : index
    %18 = vector.load %arg6[%c0_12, %c0_13] : memref<256x64xbf16, #tpu.memory_space<vmem>>, vector<256x64xbf16>
    %cst_14 = arith.constant dense<0.000000e+00> : vector<256x64xf32>
    %19 = tpu.matmul %17, %18, %cst_14 {dimension_numbers = #tpu.dot_dimension_numbers<[1], [0], [0], [1], [0, 0, 1, 1], [], []>} : vector<256x256xbf16>, vector<256x64xbf16>, vector<256x64xf32> -> vector<256x64xf32>
    %c0_15 = arith.constant 0 : index
    %c0_16 = arith.constant 0 : index
    %20 = vector.load %arg7[%c0_15, %c0_16] : memref<1x64xf32, #tpu.memory_space<vmem>>, vector<1x64xf32>
    %21 = vector.broadcast %20 : vector<1x64xf32> to vector<256x64xf32>
    %22 = arith.addf %19, %21 : vector<256x64xf32>
    %c0_17 = arith.constant 0 : index
    %c0_18 = arith.constant 0 : index
    %23 = vector.load %arg8[%c0_17, %c0_18] : memref<256x64xf32, #tpu.memory_space<vmem>>, vector<256x64xf32>
    tpu.vector_store %arg8[%c0_17, %c0_18], %22 {strides = array<i32>} : memref<256x64xf32, #tpu.memory_space<vmem>>, vector<256x64xf32>,
    return
  }
  func.func @transform_0(%arg0: i32) -> (i32, i32) {
    %c0_i32 = arith.constant 0 : i32
    %c0_i32_0 = arith.constant 0 : i32
    return %arg0, %c0_i32 : i32, i32
  }
  func.func @transform_1(%arg0: i32) -> (i32, i32) {
    %c0_i32 = arith.constant 0 : i32
    %c0_i32_0 = arith.constant 0 : i32
    %c0_i32_1 = arith.constant 0 : i32
    return %c0_i32, %c0_i32_0 : i32, i32
  }
  func.func @transform_2(%arg0: i32) -> (i32, i32) {
    %c0_i32 = arith.constant 0 : i32
    %c0_i32_0 = arith.constant 0 : i32
    %c0_i32_1 = arith.constant 0 : i32
    return %c0_i32, %c0_i32_0 : i32, i32
  }
  func.func @transform_3(%arg0: i32) -> (i32, i32) {
    %c0_i32 = arith.constant 0 : i32
    %c0_i32_0 = arith.constant 0 : i32
    %c0_i32_1 = arith.constant 0 : i32
    return %c0_i32, %c0_i32_0 : i32, i32
  }
  func.func @transform_4(%arg0: i32) -> (i32, i32) {
    %c0_i32 = arith.constant 0 : i32
    %c0_i32_0 = arith.constant 0 : i32
    %c0_i32_1 = arith.constant 0 : i32
    return %c0_i32, %c0_i32_0 : i32, i32
  }
  func.func @transform_5(%arg0: i32) -> (i32, i32) {
    %c0_i32 = arith.constant 0 : i32
    %c0_i32_0 = arith.constant 0 : i32
    %c0_i32_1 = arith.constant 0 : i32
    return %c0_i32, %c0_i32_0 : i32, i32
  }
  func.func @transform_6(%arg0: i32) -> (i32, i32) {
    %c0_i32 = arith.constant 0 : i32
    %c0_i32_0 = arith.constant 0 : i32
    %c0_i32_1 = arith.constant 0 : i32
    return %c0_i32, %c0_i32_0 : i32, i32
  }
  func.func @transform_7(%arg0: i32) -> (i32, i32) {
    %c0_i32 = arith.constant 0 : i32
    %c0_i32_0 = arith.constant 0 : i32
    return %arg0, %c0_i32 : i32, i32
  }
}

</mosaic_0001>

<llo_original>
// kernel: tpu_custom_call.1
$region0: #{tpu_custom_call.1}
  #allocation0 [shape = 'u32[]', space=smem, size = 0x4, offset = 0x4, fixed_abs, tag = 'smem constant byte address 0x4 - core index']
  #allocation1 [shape = 'u32[144,128]{1,0:T(1,128)}', space=vmem, size = 0x12000, scoped, tag = 'internal scratch']
  %s0 = inlined_call_operand.hbm [shape: f32[251,256], index: 0, kind: input, shape index: {}]
  %s1 = inlined_call_operand.hbm [shape: bf16[256,256], index: 1, kind: input, shape index: {}]
  %s2 = inlined_call_operand.vmem [shape: f32[1,256], index: 2, kind: input, shape index: {}]
  %s3 = inlined_call_operand.hbm [shape: bf16[256,256], index: 3, kind: input, shape index: {}]
  %s4 = inlined_call_operand.vmem [shape: f32[1,256], index: 4, kind: input, shape index: {}]
  %s5 = inlined_call_operand.vmem [shape: bf16[256,64], index: 5, kind: input, shape index: {}]
  %s6 = inlined_call_operand.vmem [shape: f32[1,64], index: 6, kind: input, shape index: {}]
  %s7 = inlined_call_operand.vmem [shape: f32[251,64], index: 7, kind: output, shape index: {}]
  %s8 = sld [smem:[#allocation0]]
  $region50: #{tpu_custom_call.1} parent=0
    _
  %s10 = ssub.s32 1, %s8
  %s11 = scalar_select 0, %s10, %s8
  $region1: #{tpu_custom_call.1} parent=0
    #allocation2 [shape = 'u8[262144]{0}', space=vmem, size = 0x40000, scoped, tag = 'input window, operand 0, single buffered']
    #allocation3 [shape = 's32[1]{0}', space=sflag, size = 0x4, scoped, tag = 'scoped memory for tpu_custom_call.1']
    #allocation4 [shape = 'u8[131072]{0}', space=vmem, size = 0x20000, scoped, tag = 'input window, operand 1, single buffered']
    #allocation5 [shape = 's32[1]{0}', space=sflag, size = 0x4, scoped, tag = 'scoped memory for tpu_custom_call.1']
    #allocation6 [shape = 'u8[131072]{0}', space=vmem, size = 0x20000, scoped, tag = 'input window, operand 3, single buffered']
    %12 = vsyncpa [#allocation3], 0
    %13 = vsyncpa [#allocation5], 0
    // Predicated region
    $region2: #{tpu_custom_call.1} parent=1 // pred_check
      _
    $region3: #{tpu_custom_call.1} parent=1 // pred_check_branch
      %15 = sbr.rel (0) target = $region5
    $region4: #{tpu_custom_call.1} parent=1 // pred_region
      %s17 = ssub.s32 8192, 8192
      %18 = vsyncadd [#allocation3], %s17
      %s19 = sshll.u32 [#allocation2], 4
      %s20 = int_to_ptr.vmem [resolvable:$true] %s19
      %25 = dma.hbm_to_vmem [thread:$0]  %s0, 8192, %s20, [#allocation3], 256, 256, 16
    $region5: #{tpu_custom_call.1} parent=1 // pred_fallthru
      _
    // Predicated region
    $region6: #{tpu_custom_call.1} parent=1 // pred_check
      _
    $region7: #{tpu_custom_call.1} parent=1 // pred_check_branch
      %27 = sbr.rel (0) target = $region9
    $region8: #{tpu_custom_call.1} parent=1 // pred_region
      %s29 = ssub.s32 4096, 4096
      %30 = vsyncadd [#allocation5], %s29
      %s31 = sshll.u32 [#allocation4], 4
      %s32 = int_to_ptr.vmem [resolvable:$true] %s31
      %37 = dma.hbm_to_vmem [thread:$0]  %s1, 4096, %s32, [#allocation5], 128, 128, 8
    $region9: #{tpu_custom_call.1} parent=1 // pred_fallthru
      _
    // Predicated region
    $region10: #{tpu_custom_call.1} parent=1 // pred_check
      _
    $region11: #{tpu_custom_call.1} parent=1 // pred_check_branch
      %39 = sbr.rel (0) target = $region13
    $region12: #{tpu_custom_call.1} parent=1 // pred_region
      _
    $region13: #{tpu_custom_call.1} parent=1 // pred_fallthru
      _
    // Predicated region
    $region14: #{tpu_custom_call.1} parent=1 // pred_check
      _
    $region15: #{tpu_custom_call.1} parent=1 // pred_check_branch
      %41 = sbr.rel (0) target = $region17
    $region16: #{tpu_custom_call.1} parent=1 // pred_region
      %s43 = ssub.s32 4096, 4096
      %44 = vsyncadd [#allocation5], %s43
      %s45 = sshll.u32 [#allocation6], 4
      %s46 = int_to_ptr.vmem [resolvable:$true] %s45
      %51 = dma.hbm_to_vmem [thread:$0]  %s3, 4096, %s46, [#allocation5], 128, 128, 8
    $region17: #{tpu_custom_call.1} parent=1 // pred_fallthru
      _
    // Predicated region
    $region18: #{tpu_custom_call.1} parent=1 // pred_check
      _
    $region19: #{tpu_custom_call.1} parent=1 // pred_check_branch
      %53 = sbr.rel (0) target = $region21
    $region20: #{tpu_custom_call.1} parent=1 // pred_region
      _
    $region21: #{tpu_custom_call.1} parent=1 // pred_fallthru
      _
    // Predicated region
    $region22: #{tpu_custom_call.1} parent=1 // pred_check
      _
    $region23: #{tpu_custom_call.1} parent=1 // pred_check_branch
      %55 = sbr.rel (0) target = $region25
    $region24: #{tpu_custom_call.1} parent=1 // pred_region
      _
    $region25: #{tpu_custom_call.1} parent=1 // pred_fallthru
      _
    // Predicated region
    $region26: #{tpu_custom_call.1} parent=1 // pred_check
      _
    $region27: #{tpu_custom_call.1} parent=1 // pred_check_branch
      %57 = sbr.rel (0) target = $region29
    $region28: #{tpu_custom_call.1} parent=1 // pred_region
      _
    $region29: #{tpu_custom_call.1} parent=1 // pred_fallthru
      _
    // Predicated region
    $region30: #{tpu_custom_call.1} parent=1 // pred_check
      _
    $region31: #{tpu_custom_call.1} parent=1 // pred_check_branch
      %59 = sbr.rel (0) target = $region33
    $region32: #{tpu_custom_call.1} parent=1 // pred_region
      %60 = dma.done [#allocation3], 8192
    $region33: #{tpu_custom_call.1} parent=1 // pred_fallthru
      _
    // Predicated region
    $region34: #{tpu_custom_call.1} parent=1 // pred_check
      _
    $region35: #{tpu_custom_call.1} parent=1 // pred_check_branch
      %62 = sbr.rel (0) target = $region37
    $region36: #{tpu_custom_call.1} parent=1 // pred_region
      %63 = dma.done [#allocation5], 4096
    $region37: #{tpu_custom_call.1} parent=1 // pred_fallthru
      _
    // Predicated region
    $region38: #{tpu_custom_call.1} parent=1 // pred_check
      _
    $region39: #{tpu_custom_call.1} parent=1 // pred_check_branch
      %65 = sbr.rel (0) target = $region41
    $region40: #{tpu_custom_call.1} parent=1 // pred_region
      %66 = dma.done [#allocation5], 4096
    $region41: #{tpu_custom_call.1} parent=1 // pred_fallthru
      _
    %v68 = vld [vmem:[#allocation2] sm:$0xff]
    %v69 = vld [vmem:[#allocation2 + $0x8] sm:$0xff]
    %v70 = vld [vmem:[#allocation2 + $0x10] sm:$0xff]
    %v71 = vld [vmem:[#allocation2 + $0x18] sm:$0xff]
    %v72 = vld [vmem:[#allocation2 + $0x20] sm:$0xff]
    %v73 = vld [vmem:[#allocation2 + $0x28] sm:$0xff]
    %v74 = vld [vmem:[#allocation2 + $0x30] sm:$0xff]
    %v75 = vld [vmem:[#allocation2 + $0x38] sm:$0xff]
    %v76 = vld [vmem:[#allocation2 + $0x40] sm:$0xff]
    %v77 = vld [vmem:[#allocation2 + $0x48] sm:$0xff]
    %v78 = vld [vmem:[#allocation2 + $0x50] sm:$0xff]
    %v79 = vld [vmem:[#allocation2 + $0x58] sm:$0xff]
    %v80 = vld [vmem:[#allocation2 + $0x60] sm:$0xff]
    %v81 = vld [vmem:[#allocation2 + $0x68] sm:$0xff]
    %v82 = vld [vmem:[#allocation2 + $0x70] sm:$0xff]
    %v83 = vld [vmem:[#allocation2 + $0x78] sm:$0xff]
    %v84 = vld [vmem:[#allocation2 + $0x80] sm:$0xff]
    %v85 = vld [vmem:[#allocation2 + $0x88] sm:$0xff]
    %v86 = vld [vmem:[#allocation2 + $0x90] sm:$0xff]
    %v87 = vld [vmem:[#allocation2 + $0x98] sm:$0xff]
    %v88 = vld [vmem:[#allocation2 + $0xa0] sm:$0xff]
    %v89 = vld [vmem:[#allocation2 + $0xa8] sm:$0xff]
    %v90 = vld [vmem:[#allocation2 + $0xb0] sm:$0xff]
    %v91 = vld [vmem:[#allocation2 + $0xb8] sm:$0xff]
    %v92 = vld [vmem:[#allocation2 + $0xc0] sm:$0xff]
    %v93 = vld [vmem:[#allocation2 + $0xc8] sm:$0xff]
    %v94 = vld [vmem:[#allocation2 + $0xd0] sm:$0xff]
    %v95 = vld [vmem:[#allocation2 + $0xd8] sm:$0xff]
    %v96 = vld [vmem:[#allocation2 + $0xe0] sm:$0xff]
    %v97 = vld [vmem:[#allocation2 + $0xe8] sm:$0xff]
    %v98 = vld [vmem:[#allocation2 + $0xf0] sm:$0xff]
    %v99 = vld [vmem:[#allocation2 + $0xf8] sm:$0xff]
    %v100 = vld [vmem:[#allocation2 + $0x100] sm:$0xff]
    %v101 = vld [vmem:[#allocation2 + $0x108] sm:$0xff]
    %v102 = vld [vmem:[#allocation2 + $0x110] sm:$0xff]
    %v103 = vld [vmem:[#allocation2 + $0x118] sm:$0xff]
    %v104 = vld [vmem:[#allocation2 + $0x120] sm:$0xff]
    %v105 = vld [vmem:[#allocation2 + $0x128] sm:$0xff]
    %v106 = vld [vmem:[#allocation2 + $0x130] sm:$0xff]
    %v107 = vld [vmem:[#allocation2 + $0x138] sm:$0xff]
    %v108 = vld [vmem:[#allocation2 + $0x140] sm:$0xff]
    %v109 = vld [vmem:[#allocation2 + $0x148] sm:$0xff]
    %v110 = vld [vmem:[#allocation2 + $0x150] sm:$0xff]
    %v111 = vld [vmem:[#allocation2 + $0x158] sm:$0xff]
    %v112 = vld [vmem:[#allocation2 + $0x160] sm:$0xff]
    %v113 = vld [vmem:[#allocation2 + $0x168] sm:$0xff]
    %v114 = vld [vmem:[#allocation2 + $0x170] sm:$0xff]
    %v115 = vld [vmem:[#allocation2 + $0x178] sm:$0xff]
    %v116 = vld [vmem:[#allocation2 + $0x180] sm:$0xff]
    %v117 = vld [vmem:[#allocation2 + $0x188] sm:$0xff]
    %v118 = vld [vmem:[#allocation2 + $0x190] sm:$0xff]
    %v119 = vld [vmem:[#allocation2 + $0x198] sm:$0xff]
    %v120 = vld [vmem:[#allocation2 + $0x1a0] sm:$0xff]
    %v121 = vld [vmem:[#allocation2 + $0x1a8] sm:$0xff]
    %v122 = vld [vmem:[#allocation2 + $0x1b0] sm:$0xff]
    %v123 = vld [vmem:[#allocation2 + $0x1b8] sm:$0xff]
    %v124 = vld [vmem:[#allocation2 + $0x1c0] sm:$0xff]
    %v125 = vld [vmem:[#allocation2 + $0x1c8] sm:$0xff]
    %v126 = vld [vmem:[#allocation2 + $0x1d0] sm:$0xff]
    %v127 = vld [vmem:[#allocation2 + $0x1d8] sm:$0xff]
    %v128 = vld [vmem:[#allocation2 + $0x1e0] sm:$0xff]
    %v129 = vld [vmem:[#allocation2 + $0x1e8] sm:$0xff]
    %v130 = vld [vmem:[#allocation2 + $0x1f0] sm:$0xff]
    %v131 = vld [vmem:[#allocation2 + $0x1f8] sm:$0xff]
    %v132 = vpack.c.bf16 %v70, %v68
    %v133 = vpack.c.bf16 %v71, %v69
    %v134 = vpack.c.bf16 %v74, %v72
    %v135 = vpack.c.bf16 %v75, %v73
    %v136 = vpack.c.bf16 %v78, %v76
    %v137 = vpack.c.bf16 %v79, %v77
    %v138 = vpack.c.bf16 %v82, %v80
    %v139 = vpack.c.bf16 %v83, %v81
    %v140 = vpack.c.bf16 %v86, %v84
    %v141 = vpack.c.bf16 %v87, %v85
    %v142 = vpack.c.bf16 %v90, %v88
    %v143 = vpack.c.bf16 %v91, %v89
    %v144 = vpack.c.bf16 %v94, %v92
    %v145 = vpack.c.bf16 %v95, %v93
    %v146 = vpack.c.bf16 %v98, %v96
    %v147 = vpack.c.bf16 %v99, %v97
    %v148 = vpack.c.bf16 %v102, %v100
    %v149 = vpack.c.bf16 %v103, %v101
    %v150 = vpack.c.bf16 %v106, %v104
    %v151 = vpack.c.bf16 %v107, %v105
    %v152 = vpack.c.bf16 %v110, %v108
    %v153 = vpack.c.bf16 %v111, %v109
    %v154 = vpack.c.bf16 %v114, %v112
    %v155 = vpack.c.bf16 %v115, %v113
    %v156 = vpack.c.bf16 %v118, %v116
    %v157 = vpack.c.bf16 %v119, %v117
    %v158 = vpack.c.bf16 %v122, %v120
    %v159 = vpack.c.bf16 %v123, %v121
    %v160 = vpack.c.bf16 %v126, %v124
    %v161 = vpack.c.bf16 %v127, %v125
    %v162 = vpack.c.bf16 %v130, %v128
    %v163 = vpack.c.bf16 %v131, %v129
    %v164 = vld [vmem:[#allocation4] sm:$0xff]
    %v165 = vld [vmem:[#allocation4 + $0x8] sm:$0xff]
    %v166 = vld [vmem:[#allocation4 + $0x10] sm:$0xff]
    %v167 = vld [vmem:[#allocation4 + $0x18] sm:$0xff]
    %v168 = vld [vmem:[#allocation4 + $0x20] sm:$0xff]
    %v169 = vld [vmem:[#allocation4 + $0x28] sm:$0xff]
    %v170 = vld [vmem:[#allocation4 + $0x30] sm:$0xff]
    %v171 = vld [vmem:[#allocation4 + $0x38] sm:$0xff]
    %v172 = vld [vmem:[#allocation4 + $0x40] sm:$0xff]
    %v173 = vld [vmem:[#allocation4 + $0x48] sm:$0xff]
    %v174 = vld [vmem:[#allocation4 + $0x50] sm:$0xff]
    %v175 = vld [vmem:[#allocation4 + $0x58] sm:$0xff]
    %v176 = vld [vmem:[#allocation4 + $0x60] sm:$0xff]
    %v177 = vld [vmem:[#allocation4 + $0x68] sm:$0xff]
    %v178 = vld [vmem:[#allocation4 + $0x70] sm:$0xff]
    %v179 = vld [vmem:[#allocation4 + $0x78] sm:$0xff]
    %v180 = vld [vmem:[#allocation4 + $0x80] sm:$0xff]
    %v181 = vld [vmem:[#allocation4 + $0x88] sm:$0xff]
    %v182 = vld [vmem:[#allocation4 + $0x90] sm:$0xff]
    %v183 = vld [vmem:[#allocation4 + $0x98] sm:$0xff]
    %v184 = vld [vmem:[#allocation4 + $0xa0] sm:$0xff]
    %v185 = vld [vmem:[#allocation4 + $0xa8] sm:$0xff]
    %v186 = vld [vmem:[#allocation4 + $0xb0] sm:$0xff]
    %v187 = vld [vmem:[#allocation4 + $0xb8] sm:$0xff]
    %v188 = vld [vmem:[#allocation4 + $0xc0] sm:$0xff]
    %v189 = vld [vmem:[#allocation4 + $0xc8] sm:$0xff]
    %v190 = vld [vmem:[#allocation4 + $0xd0] sm:$0xff]
    %v191 = vld [vmem:[#allocation4 + $0xd8] sm:$0xff]
    %v192 = vld [vmem:[#allocation4 + $0xe0] sm:$0xff]
    %v193 = vld [vmem:[#allocation4 + $0xe8] sm:$0xff]
    %v194 = vld [vmem:[#allocation4 + $0xf0] sm:$0xff]
    %v195 = vld [vmem:[#allocation4 + $0xf8] sm:$0xff]
    %v196 = vld [vmem:[%s2] sm:$0x3]
    %v198 = vlaneseq
    %v199 = vshrl.u32 %v198, 7
    %v200 = vsub.s32 0, %v199
    %v201 = vrot.slane %v196, %v200
    %v202 = vlaneseq
    %v203 = vshrl.u32 %v202, 7
    %v204 = vsub.s32 1, %v203
    %v205 = vrot.slane %v196, %v204
    %v240 = vunpack.c.l.b16 %v164
    %v241 = vunpack.c.h.b16 %v164
    %v242 = vunpack.c.l.b16 %v165
    %v243 = vunpack.c.h.b16 %v165
    %v244 = vunpack.c.l.b16 %v166
    %v245 = vunpack.c.h.b16 %v166
    %v246 = vunpack.c.l.b16 %v167
    %v247 = vunpack.c.h.b16 %v167
    %v248 = vunpack.c.l.b16 %v168
    %v249 = vunpack.c.h.b16 %v168
    %v250 = vunpack.c.l.b16 %v169
    %v251 = vunpack.c.h.b16 %v169
    %v252 = vunpack.c.l.b16 %v170
    %v253 = vunpack.c.h.b16 %v170
    %v254 = vunpack.c.l.b16 %v171
    %v255 = vunpack.c.h.b16 %v171
    %v256 = vunpack.c.l.b16 %v172
    %v257 = vunpack.c.h.b16 %v172
    %v258 = vunpack.c.l.b16 %v173
    %v259 = vunpack.c.h.b16 %v173
    %v260 = vunpack.c.l.b16 %v174
    %v261 = vunpack.c.h.b16 %v174
    %v262 = vunpack.c.l.b16 %v175
    %v263 = vunpack.c.h.b16 %v175
    %v264 = vunpack.c.l.b16 %v176
    %v265 = vunpack.c.h.b16 %v176
    %v266 = vunpack.c.l.b16 %v177
    %v267 = vunpack.c.h.b16 %v177
    %v268 = vunpack.c.l.b16 %v178
    %v269 = vunpack.c.h.b16 %v178
    %v270 = vunpack.c.l.b16 %v179
    %v271 = vunpack.c.h.b16 %v179
    %v272 = vunpack.c.l.b16 %v180
    %v273 = vunpack.c.h.b16 %v180
    %v274 = vunpack.c.l.b16 %v181
    %v275 = vunpack.c.h.b16 %v181
    %v276 = vunpack.c.l.b16 %v182
    %v277 = vunpack.c.h.b16 %v182
    %v278 = vunpack.c.l.b16 %v183
    %v279 = vunpack.c.h.b16 %v183
    %v280 = vunpack.c.l.b16 %v184
    %v281 = vunpack.c.h.b16 %v184
    %v282 = vunpack.c.l.b16 %v185
    %v283 = vunpack.c.h.b16 %v185
    %v284 = vunpack.c.l.b16 %v186
    %v285 = vunpack.c.h.b16 %v186
    %v286 = vunpack.c.l.b16 %v187
    %v287 = vunpack.c.h.b16 %v187
    %v288 = vunpack.c.l.b16 %v188
    %v289 = vunpack.c.h.b16 %v188
    %v290 = vunpack.c.l.b16 %v189
    %v291 = vunpack.c.h.b16 %v189
    %v292 = vunpack.c.l.b16 %v190
    %v293 = vunpack.c.h.b16 %v190
    %v294 = vunpack.c.l.b16 %v191
    %v295 = vunpack.c.h.b16 %v191
    %v296 = vunpack.c.l.b16 %v192
    %v297 = vunpack.c.h.b16 %v192
    %v298 = vunpack.c.l.b16 %v193
    %v299 = vunpack.c.h.b16 %v193
    %v300 = vunpack.c.l.b16 %v194
    %v301 = vunpack.c.h.b16 %v194
    %v302 = vunpack.c.l.b16 %v195
    %v303 = vunpack.c.h.b16 %v195
    %v304 = vpack.c.b16 %v242, %v240
    %v305 = vpack.c.b16 %v243, %v241
    %v306 = vpack.c.b16 %v246, %v244
    %v307 = vpack.c.b16 %v247, %v245
    %v308 = vpack.c.b16 %v250, %v248
    %v309 = vpack.c.b16 %v251, %v249
    %v310 = vpack.c.b16 %v254, %v252
    %v311 = vpack.c.b16 %v255, %v253
    %v312 = vpack.c.b16 %v258, %v256
    %v313 = vpack.c.b16 %v259, %v257
    %v314 = vpack.c.b16 %v262, %v260
    %v315 = vpack.c.b16 %v263, %v261
    %v316 = vpack.c.b16 %v266, %v264
    %v317 = vpack.c.b16 %v267, %v265
    %v318 = vpack.c.b16 %v270, %v268
    %v319 = vpack.c.b16 %v271, %v269
    %v320 = vpack.c.b16 %v274, %v272
    %v321 = vpack.c.b16 %v275, %v273
    %v322 = vpack.c.b16 %v278, %v276
    %v323 = vpack.c.b16 %v279, %v277
    %v324 = vpack.c.b16 %v282, %v280
    %v325 = vpack.c.b16 %v283, %v281
    %v326 = vpack.c.b16 %v286, %v284
    %v327 = vpack.c.b16 %v287, %v285
    %v328 = vpack.c.b16 %v290, %v288
    %v329 = vpack.c.b16 %v291, %v289
    %v330 = vpack.c.b16 %v294, %v292
    %v331 = vpack.c.b16 %v295, %v293
    %v332 = vpack.c.b16 %v298, %v296
    %v333 = vpack.c.b16 %v299, %v297
    %v334 = vpack.c.b16 %v302, %v300
    %v335 = vpack.c.b16 %v303, %v301
    %368 = vmatprep.subr.bf16.mxu0 %v305
    %369 = vmatpush1.bf16.msra.mxu0 %v304
    %370 = vmatprep.subr.bf16.mxu0 %v307
    %371 = vmatpush1.bf16.msra.mxu0 %v306
    %372 = vmatprep.subr.bf16.mxu0 %v309
    %373 = vmatpush1.bf16.msra.mxu0 %v308
    %374 = vmatprep.subr.bf16.mxu0 %v311
    %375 = vmatpush1.bf16.msra.mxu0 %v310
    %376 = vmatprep.subr.bf16.mxu0 %v313
    %377 = vmatpush1.bf16.msra.mxu0 %v312
    %378 = vmatprep.subr.bf16.mxu0 %v315
    %379 = vmatpush1.bf16.msra.mxu0 %v314
    %380 = vmatprep.subr.bf16.mxu0 %v317
    %381 = vmatpush1.bf16.msra.mxu0 %v316
    %382 = vmatprep.subr.bf16.mxu0 %v319
    %383 = vmatpush1.bf16.msra.mxu0 %v318
    %384 = vmatprep.subr.bf16.mxu0 %v321
    %385 = vmatpush1.bf16.msra.mxu0 %v320
    %386 = vmatprep.subr.bf16.mxu0 %v323
    %387 = vmatpush1.bf16.msra.mxu0 %v322
    %388 = vmatprep.subr.bf16.mxu0 %v325
    %389 = vmatpush1.bf16.msra.mxu0 %v324
    %390 = vmatprep.subr.bf16.mxu0 %v327
    %391 = vmatpush1.bf16.msra.mxu0 %v326
    %392 = vmatprep.subr.bf16.mxu0 %v329
    %393 = vmatpush1.bf16.msra.mxu0 %v328
    %394 = vmatprep.subr.bf16.mxu0 %v331
    %395 = vmatpush1.bf16.msra.mxu0 %v330
    %396 = vmatprep.subr.bf16.mxu0 %v333
    %397 = vmatpush1.bf16.msra.mxu0 %v332
    %398 = vmatprep.subr.bf16.mxu0 %v335
    %399 = vmatpush1.bf16.msra.mxu0 %v334
    %400 = vmatprep.mubr.bf16.mxu0 %v133
    %401 = vmatmul.mubr.bf16.gmra.mrb[0].mxu0 %v132
    %v402 = vpop.f32.mrb[0].mxu0
    %v403 = vadd.f32 %v201, %v402
    %v404 = vpop.f32.mrb[0].mxu0
    %v405 = vadd.f32 %v205, %v404
    %v406 = vpop.f32.mrb[0].mxu0
    %v407 = vadd.f32 %v201, %v406
    %v408 = vpop.f32.mrb[0].mxu0
    %v409 = vadd.f32 %v205, %v408
    %410 = vmatprep.mubr.bf16.mxu0 %v135
    %411 = vmatmul.mubr.bf16.gmra.mrb[0].mxu0 %v134
    %v412 = vpop.f32.mrb[0].mxu0
    %v413 = vadd.f32 %v201, %v412
    %v414 = vpop.f32.mrb[0].mxu0
    %v415 = vadd.f32 %v205, %v414
    %v416 = vpop.f32.mrb[0].mxu0
    %v417 = vadd.f32 %v201, %v416
    %v418 = vpop.f32.mrb[0].mxu0
    %v419 = vadd.f32 %v205, %v418
    %420 = vmatprep.mubr.bf16.mxu0 %v137
    %421 = vmatmul.mubr.bf16.gmra.mrb[0].mxu0 %v136
    %v422 = vpop.f32.mrb[0].mxu0
    %v423 = vadd.f32 %v201, %v422
    %v424 = vpop.f32.mrb[0].mxu0
    %v425 = vadd.f32 %v205, %v424
    %v426 = vpop.f32.mrb[0].mxu0
    %v427 = vadd.f32 %v201, %v426
    %v428 = vpop.f32.mrb[0].mxu0
    %v429 = vadd.f32 %v205, %v428
    %430 = vmatprep.mubr.bf16.mxu0 %v139
    %431 = vmatmul.mubr.bf16.gmra.mrb[0].mxu0 %v138
    %v432 = vpop.f32.mrb[0].mxu0
    %v433 = vadd.f32 %v201, %v432
    %v434 = vpop.f32.mrb[0].mxu0
    %v435 = vadd.f32 %v205, %v434
    %v436 = vpop.f32.mrb[0].mxu0
    %v437 = vadd.f32 %v201, %v436
    %v438 = vpop.f32.mrb[0].mxu0
    %v439 = vadd.f32 %v205, %v438
    %440 = vmatprep.mubr.bf16.mxu0 %v141
    %441 = vmatmul.mubr.bf16.gmra.mrb[0].mxu0 %v140
    %v442 = vpop.f32.mrb[0].mxu0
    %v443 = vadd.f32 %v201, %v442
    %v444 = vpop.f32.mrb[0].mxu0
    %v445 = vadd.f32 %v205, %v444
    %v446 = vpop.f32.mrb[0].mxu0
    %v447 = vadd.f32 %v201, %v446
    %v448 = vpop.f32.mrb[0].mxu0
    %v449 = vadd.f32 %v205, %v448
    %450 = vmatprep.mubr.bf16.mxu0 %v143
    %451 = vmatmul.mubr.bf16.gmra.mrb[0].mxu0 %v142
    %v452 = vpop.f32.mrb[0].mxu0
    %v453 = vadd.f32 %v201, %v452
    %v454 = vpop.f32.mrb[0].mxu0
    %v455 = vadd.f32 %v205, %v454
    %v456 = vpop.f32.mrb[0].mxu0
    %v457 = vadd.f32 %v201, %v456
    %v458 = vpop.f32.mrb[0].mxu0
    %v459 = vadd.f32 %v205, %v458
    %460 = vmatprep.mubr.bf16.mxu0 %v145
    %461 = vmatmul.mubr.bf16.gmra.mrb[0].mxu0 %v144
    %v462 = vpop.f32.mrb[0].mxu0
    %v463 = vadd.f32 %v201, %v462
    %v464 = vpop.f32.mrb[0].mxu0
    %v465 = vadd.f32 %v205, %v464
    %v466 = vpop.f32.mrb[0].mxu0
    %v467 = vadd.f32 %v201, %v466
    %v468 = vpop.f32.mrb[0].mxu0
    %v469 = vadd.f32 %v205, %v468
    %470 = vmatprep.mubr.bf16.mxu0 %v147
    %471 = vmatmul.mubr.bf16.gmra.mrb[0].mxu0 %v146
    %v472 = vpop.f32.mrb[0].mxu0
    %v473 = vadd.f32 %v201, %v472
    %v474 = vpop.f32.mrb[0].mxu0
    %v475 = vadd.f32 %v205, %v474
    %v476 = vpop.f32.mrb[0].mxu0
    %v477 = vadd.f32 %v201, %v476
    %v478 = vpop.f32.mrb[0].mxu0
    %v479 = vadd.f32 %v205, %v478
    %480 = vmatprep.mubr.bf16.mxu0 %v149
    %481 = vmatmul.mubr.bf16.gmra.mrb[0].mxu0 %v148
    %v482 = vpop.f32.mrb[0].mxu0
    %v483 = vadd.f32 %v201, %v482
    %v484 = vpop.f32.mrb[0].mxu0
    %v485 = vadd.f32 %v205, %v484
    %v486 = vpop.f32.mrb[0].mxu0
    %v487 = vadd.f32 %v201, %v486
    %v488 = vpop.f32.mrb[0].mxu0
    %v489 = vadd.f32 %v205, %v488
    %490 = vmatprep.mubr.bf16.mxu0 %v151
    %491 = vmatmul.mubr.bf16.gmra.mrb[0].mxu0 %v150
    %v492 = vpop.f32.mrb[0].mxu0
    %v493 = vadd.f32 %v201, %v492
    %v494 = vpop.f32.mrb[0].mxu0
    %v495 = vadd.f32 %v205, %v494
    %v496 = vpop.f32.mrb[0].mxu0
    %v497 = vadd.f32 %v201, %v496
    %v498 = vpop.f32.mrb[0].mxu0
    %v499 = vadd.f32 %v205, %v498
    %500 = vmatprep.mubr.bf16.mxu0 %v153
    %501 = vmatmul.mubr.bf16.gmra.mrb[0].mxu0 %v152
    %v502 = vpop.f32.mrb[0].mxu0
    %v503 = vadd.f32 %v201, %v502
    %v504 = vpop.f32.mrb[0].mxu0
    %v505 = vadd.f32 %v205, %v504
    %v506 = vpop.f32.mrb[0].mxu0
    %v507 = vadd.f32 %v201, %v506
    %v508 = vpop.f32.mrb[0].mxu0
    %v509 = vadd.f32 %v205, %v508
    %510 = vmatprep.mubr.bf16.mxu0 %v155
    %511 = vmatmul.mubr.bf16.gmra.mrb[0].mxu0 %v154
    %v512 = vpop.f32.mrb[0].mxu0
    %v513 = vadd.f32 %v201, %v512
    %v514 = vpop.f32.mrb[0].mxu0
    %v515 = vadd.f32 %v205, %v514
    %v516 = vpop.f32.mrb[0].mxu0
    %v517 = vadd.f32 %v201, %v516
    %v518 = vpop.f32.mrb[0].mxu0
    %v519 = vadd.f32 %v205, %v518
    %520 = vmatprep.mubr.bf16.mxu0 %v157
    %521 = vmatmul.mubr.bf16.gmra.mrb[0].mxu0 %v156
    %v522 = vpop.f32.mrb[0].mxu0
    %v523 = vadd.f32 %v201, %v522
    %v524 = vpop.f32.mrb[0].mxu0
    %v525 = vadd.f32 %v205, %v524
    %v526 = vpop.f32.mrb[0].mxu0
    %v527 = vadd.f32 %v201, %v526
    %v528 = vpop.f32.mrb[0].mxu0
    %v529 = vadd.f32 %v205, %v528
    %530 = vmatprep.mubr.bf16.mxu0 %v159
    %531 = vmatmul.mubr.bf16.gmra.mrb[0].mxu0 %v158
    %v532 = vpop.f32.mrb[0].mxu0
    %v533 = vadd.f32 %v201, %v532
    %v534 = vpop.f32.mrb[0].mxu0
    %v535 = vadd.f32 %v205, %v534
    %v536 = vpop.f32.mrb[0].mxu0
    %v537 = vadd.f32 %v201, %v536
    %v538 = vpop.f32.mrb[0].mxu0
    %v539 = vadd.f32 %v205, %v538
    %540 = vmatprep.mubr.bf16.mxu0 %v161
    %541 = vmatmul.mubr.bf16.gmra.mrb[0].mxu0 %v160
    %v542 = vpop.f32.mrb[0].mxu0
    %v543 = vadd.f32 %v201, %v542
    %v544 = vpop.f32.mrb[0].mxu0
    %v545 = vadd.f32 %v205, %v544
    %v546 = vpop.f32.mrb[0].mxu0
    %v547 = vadd.f32 %v201, %v546
    %v548 = vpop.f32.mrb[0].mxu0
    %v549 = vadd.f32 %v205, %v548
    %550 = vmatprep.mubr.bf16.mxu0 %v163
    %551 = vmatmul.mubr.bf16.gmra.mrb[0].mxu0 %v162
    %v552 = vpop.f32.mrb[0].mxu0
    %v553 = vadd.f32 %v201, %v552
    %v554 = vpop.f32.mrb[0].mxu0
    %v555 = vadd.f32 %v205, %v554
    %v556 = vpop.f32.mrb[0].mxu0
    %v557 = vadd.f32 %v201, %v556
    %v558 = vpop.f32.mrb[0].mxu0
    %v559 = vadd.f32 %v205, %v558
    %560 = vdwg.mxu0
    %v561 = vmax.f32 %v403, 0.0
    %v562 = vmax.f32 %v405, 0.0
    %v563 = vmax.f32 %v407, 0.0
    %v564 = vmax.f32 %v409, 0.0
    %v565 = vmax.f32 %v413, 0.0
    %v566 = vmax.f32 %v415, 0.0
    %v567 = vmax.f32 %v417, 0.0
    %v568 = vmax.f32 %v419, 0.0
    %v569 = vmax.f32 %v423, 0.0
    %v570 = vmax.f32 %v425, 0.0
    %v571 = vmax.f32 %v427, 0.0
    %v572 = vmax.f32 %v429, 0.0
    %v573 = vmax.f32 %v433, 0.0
    %v574 = vmax.f32 %v435, 0.0
    %v575 = vmax.f32 %v437, 0.0
    %v576 = vmax.f32 %v439, 0.0
    %v577 = vmax.f32 %v443, 0.0
    %v578 = vmax.f32 %v445, 0.0
    %v579 = vmax.f32 %v447, 0.0
    %v580 = vmax.f32 %v449, 0.0
    %v581 = vmax.f32 %v453, 0.0
    %v582 = vmax.f32 %v455, 0.0
    %v583 = vmax.f32 %v457, 0.0
    %v584 = vmax.f32 %v459, 0.0
    %v585 = vmax.f32 %v463, 0.0
    %v586 = vmax.f32 %v465, 0.0
    %v587 = vmax.f32 %v467, 0.0
    %v588 = vmax.f32 %v469, 0.0
    %v589 = vmax.f32 %v473, 0.0
    %v590 = vmax.f32 %v475, 0.0
    %v591 = vmax.f32 %v477, 0.0
    %v592 = vmax.f32 %v479, 0.0
    %v593 = vmax.f32 %v483, 0.0
    %v594 = vmax.f32 %v485, 0.0
    %v595 = vmax.f32 %v487, 0.0
    %v596 = vmax.f32 %v489, 0.0
    %v597 = vmax.f32 %v493, 0.0
    %v598 = vmax.f32 %v495, 0.0
    %v599 = vmax.f32 %v497, 0.0
    %v600 = vmax.f32 %v499, 0.0
    %v601 = vmax.f32 %v503, 0.0
    %v602 = vmax.f32 %v505, 0.0
    %v603 = vmax.f32 %v507, 0.0
    %v604 = vmax.f32 %v509, 0.0
    %v605 = vmax.f32 %v513, 0.0
    %v606 = vmax.f32 %v515, 0.0
    %v607 = vmax.f32 %v517, 0.0
    %v608 = vmax.f32 %v519, 0.0
    %v609 = vmax.f32 %v523, 0.0
    %v610 = vmax.f32 %v525, 0.0
    %v611 = vmax.f32 %v527, 0.0
    %v612 = vmax.f32 %v529, 0.0
    %v613 = vmax.f32 %v533, 0.0
    %v614 = vmax.f32 %v535, 0.0
    %v615 = vmax.f32 %v537, 0.0
    %v616 = vmax.f32 %v539, 0.0
    %v617 = vmax.f32 %v543, 0.0
    %v618 = vmax.f32 %v545, 0.0
    %v619 = vmax.f32 %v547, 0.0
    %v620 = vmax.f32 %v549, 0.0
    %v621 = vmax.f32 %v553, 0.0
    %v622 = vmax.f32 %v555, 0.0
    %v623 = vmax.f32 %v557, 0.0
    %v624 = vmax.f32 %v559, 0.0
    %v625 = vpack.c.bf16 %v563, %v561
    %v626 = vpack.c.bf16 %v564, %v562
    %v627 = vpack.c.bf16 %v567, %v565
    %v628 = vpack.c.bf16 %v568, %v566
    %v629 = vpack.c.bf16 %v571, %v569
    %v630 = vpack.c.bf16 %v572, %v570
    %v631 = vpack.c.bf16 %v575, %v573
    %v632 = vpack.c.bf16 %v576, %v574
    %v633 = vpack.c.bf16 %v579, %v577
    %v634 = vpack.c.bf16 %v580, %v578
    %v635 = vpack.c.bf16 %v583, %v581
    %v636 = vpack.c.bf16 %v584, %v582
    %v637 = vpack.c.bf16 %v587, %v585
    %v638 = vpack.c.bf16 %v588, %v586
    %v639 = vpack.c.bf16 %v591, %v589
    %v640 = vpack.c.bf16 %v592, %v590
    %v641 = vpack.c.bf16 %v595, %v593
    %v642 = vpack.c.bf16 %v596, %v594
    %v643 = vpack.c.bf16 %v599, %v597
    %v644 = vpack.c.bf16 %v600, %v598
    %v645 = vpack.c.bf16 %v603, %v601
    %v646 = vpack.c.bf16 %v604, %v602
    %v647 = vpack.c.bf16 %v607, %v605
    %v648 = vpack.c.bf16 %v608, %v606
    %v649 = vpack.c.bf16 %v611, %v609
    %v650 = vpack.c.bf16 %v612, %v610
    %v651 = vpack.c.bf16 %v615, %v613
    %v652 = vpack.c.bf16 %v616, %v614
    %v653 = vpack.c.bf16 %v619, %v617
    %v654 = vpack.c.bf16 %v620, %v618
    %v655 = vpack.c.bf16 %v623, %v621
    %v656 = vpack.c.bf16 %v624, %v622
    %v657 = vld [vmem:[#allocation6] sm:$0xff]
    %v658 = vld [vmem:[#allocation6 + $0x8] sm:$0xff]
    %v659 = vld [vmem:[#allocation6 + $0x10] sm:$0xff]
    %v660 = vld [vmem:[#allocation6 + $0x18] sm:$0xff]
    %v661 = vld [vmem:[#allocation6 + $0x20] sm:$0xff]
    %v662 = vld [vmem:[#allocation6 + $0x28] sm:$0xff]
    %v663 = vld [vmem:[#allocation6 + $0x30] sm:$0xff]
    %v664 = vld [vmem:[#allocation6 + $0x38] sm:$0xff]
    %v665 = vld [vmem:[#allocation6 + $0x40] sm:$0xff]
    %v666 = vld [vmem:[#allocation6 + $0x48] sm:$0xff]
    %v667 = vld [vmem:[#allocation6 + $0x50] sm:$0xff]
    %v668 = vld [vmem:[#allocation6 + $0x58] sm:$0xff]
    %v669 = vld [vmem:[#allocation6 + $0x60] sm:$0xff]
    %v670 = vld [vmem:[#allocation6 + $0x68] sm:$0xff]
    %v671 = vld [vmem:[#allocation6 + $0x70] sm:$0xff]
    %v672 = vld [vmem:[#allocation6 + $0x78] sm:$0xff]
    %v673 = vld [vmem:[#allocation6 + $0x80] sm:$0xff]
    %v674 = vld [vmem:[#allocation6 + $0x88] sm:$0xff]
    %v675 = vld [vmem:[#allocation6 + $0x90] sm:$0xff]
    %v676 = vld [vmem:[#allocation6 + $0x98] sm:$0xff]
    %v677 = vld [vmem:[#allocation6 + $0xa0] sm:$0xff]
    %v678 = vld [vmem:[#allocation6 + $0xa8] sm:$0xff]
    %v679 = vld [vmem:[#allocation6 + $0xb0] sm:$0xff]
    %v680 = vld [vmem:[#allocation6 + $0xb8] sm:$0xff]
    %v681 = vld [vmem:[#allocation6 + $0xc0] sm:$0xff]
    %v682 = vld [vmem:[#allocation6 + $0xc8] sm:$0xff]
    %v683 = vld [vmem:[#allocation6 + $0xd0] sm:$0xff]
    %v684 = vld [vmem:[#allocation6 + $0xd8] sm:$0xff]
    %v685 = vld [vmem:[#allocation6 + $0xe0] sm:$0xff]
    %v686 = vld [vmem:[#allocation6 + $0xe8] sm:$0xff]
    %v687 = vld [vmem:[#allocation6 + $0xf0] sm:$0xff]
    %v688 = vld [vmem:[#allocation6 + $0xf8] sm:$0xff]
    %v689 = vld [vmem:[%s4] sm:$0x3]
    %v691 = vlaneseq
    %v692 = vshrl.u32 %v691, 7
    %v693 = vsub.s32 0, %v692
    %v694 = vrot.slane %v689, %v693
    %v695 = vlaneseq
    %v696 = vshrl.u32 %v695, 7
    %v697 = vsub.s32 1, %v696
    %v698 = vrot.slane %v689, %v697
    %v733 = vunpack.c.l.b16 %v657
    %v734 = vunpack.c.h.b16 %v657
    %v735 = vunpack.c.l.b16 %v658
    %v736 = vunpack.c.h.b16 %v658
    %v737 = vunpack.c.l.b16 %v659
    %v738 = vunpack.c.h.b16 %v659
    %v739 = vunpack.c.l.b16 %v660
    %v740 = vunpack.c.h.b16 %v660
    %v741 = vunpack.c.l.b16 %v661
    %v742 = vunpack.c.h.b16 %v661
    %v743 = vunpack.c.l.b16 %v662
    %v744 = vunpack.c.h.b16 %v662
    %v745 = vunpack.c.l.b16 %v663
    %v746 = vunpack.c.h.b16 %v663
    %v747 = vunpack.c.l.b16 %v664
    %v748 = vunpack.c.h.b16 %v664
    %v749 = vunpack.c.l.b16 %v665
    %v750 = vunpack.c.h.b16 %v665
    %v751 = vunpack.c.l.b16 %v666
    %v752 = vunpack.c.h.b16 %v666
    %v753 = vunpack.c.l.b16 %v667
    %v754 = vunpack.c.h.b16 %v667
    %v755 = vunpack.c.l.b16 %v668
    %v756 = vunpack.c.h.b16 %v668
    %v757 = vunpack.c.l.b16 %v669
    %v758 = vunpack.c.h.b16 %v669
    %v759 = vunpack.c.l.b16 %v670
    %v760 = vunpack.c.h.b16 %v670
    %v761 = vunpack.c.l.b16 %v671
    %v762 = vunpack.c.h.b16 %v671
    %v763 = vunpack.c.l.b16 %v672
    %v764 = vunpack.c.h.b16 %v672
    %v765 = vunpack.c.l.b16 %v673
    %v766 = vunpack.c.h.b16 %v673
    %v767 = vunpack.c.l.b16 %v674
    %v768 = vunpack.c.h.b16 %v674
    %v769 = vunpack.c.l.b16 %v675
    %v770 = vunpack.c.h.b16 %v675
    %v771 = vunpack.c.l.b16 %v676
    %v772 = vunpack.c.h.b16 %v676
    %v773 = vunpack.c.l.b16 %v677
    %v774 = vunpack.c.h.b16 %v677
    %v775 = vunpack.c.l.b16 %v678
    %v776 = vunpack.c.h.b16 %v678
    %v777 = vunpack.c.l.b16 %v679
    %v778 = vunpack.c.h.b16 %v679
    %v779 = vunpack.c.l.b16 %v680
    %v780 = vunpack.c.h.b16 %v680
    %v781 = vunpack.c.l.b16 %v681
    %v782 = vunpack.c.h.b16 %v681
    %v783 = vunpack.c.l.b16 %v682
    %v784 = vunpack.c.h.b16 %v682
    %v785 = vunpack.c.l.b16 %v683
    %v786 = vunpack.c.h.b16 %v683
    %v787 = vunpack.c.l.b16 %v684
    %v788 = vunpack.c.h.b16 %v684
    %v789 = vunpack.c.l.b16 %v685
    %v790 = vunpack.c.h.b16 %v685
    %v791 = vunpack.c.l.b16 %v686
    %v792 = vunpack.c.h.b16 %v686
    %v793 = vunpack.c.l.b16 %v687
    %v794 = vunpack.c.h.b16 %v687
    %v795 = vunpack.c.l.b16 %v688
    %v796 = vunpack.c.h.b16 %v688
    %v797 = vpack.c.b16 %v735, %v733
    %v798 = vpack.c.b16 %v736, %v734
    %v799 = vpack.c.b16 %v739, %v737
    %v800 = vpack.c.b16 %v740, %v738
    %v801 = vpack.c.b16 %v743, %v741
    %v802 = vpack.c.b16 %v744, %v742
    %v803 = vpack.c.b16 %v747, %v745
    %v804 = vpack.c.b16 %v748, %v746
    %v805 = vpack.c.b16 %v751, %v749
    %v806 = vpack.c.b16 %v752, %v750
    %v807 = vpack.c.b16 %v755, %v753
    %v808 = vpack.c.b16 %v756, %v754
    %v809 = vpack.c.b16 %v759, %v757
    %v810 = vpack.c.b16 %v760, %v758
    %v811 = vpack.c.b16 %v763, %v761
    %v812 = vpack.c.b16 %v764, %v762
    %v813 = vpack.c.b16 %v767, %v765
    %v814 = vpack.c.b16 %v768, %v766
    %v815 = vpack.c.b16 %v771, %v769
    %v816 = vpack.c.b16 %v772, %v770
    %v817 = vpack.c.b16 %v775, %v773
    %v818 = vpack.c.b16 %v776, %v774
    %v819 = vpack.c.b16 %v779, %v777
    %v820 = vpack.c.b16 %v780, %v778
    %v821 = vpack.c.b16 %v783, %v781
    %v822 = vpack.c.b16 %v784, %v782
    %v823 = vpack.c.b16 %v787, %v785
    %v824 = vpack.c.b16 %v788, %v786
    %v825 = vpack.c.b16 %v791, %v789
    %v826 = vpack.c.b16 %v792, %v790
    %v827 = vpack.c.b16 %v795, %v793
    %v828 = vpack.c.b16 %v796, %v794
    %861 = vmatprep.subr.bf16.mxu0 %v798
    %862 = vmatpush1.bf16.msra.mxu0 %v797
    %863 = vmatprep.subr.bf16.mxu0 %v800
    %864 = vmatpush1.bf16.msra.mxu0 %v799
    %865 = vmatprep.subr.bf16.mxu0 %v802
    %866 = vmatpush1.bf16.msra.mxu0 %v801
    %867 = vmatprep.subr.bf16.mxu0 %v804
    %868 = vmatpush1.bf16.msra.mxu0 %v803
    %869 = vmatprep.subr.bf16.mxu0 %v806
    %870 = vmatpush1.bf16.msra.mxu0 %v805
    %871 = vmatprep.subr.bf16.mxu0 %v808
    %872 = vmatpush1.bf16.msra.mxu0 %v807
    %873 = vmatprep.subr.bf16.mxu0 %v810
    %874 = vmatpush1.bf16.msra.mxu0 %v809
    %875 = vmatprep.subr.bf16.mxu0 %v812
    %876 = vmatpush1.bf16.msra.mxu0 %v811
    %877 = vmatprep.subr.bf16.mxu0 %v814
    %878 = vmatpush1.bf16.msra.mxu0 %v813
    %879 = vmatprep.subr.bf16.mxu0 %v816
    %880 = vmatpush1.bf16.msra.mxu0 %v815
    %881 = vmatprep.subr.bf16.mxu0 %v818
    %882 = vmatpush1.bf16.msra.mxu0 %v817
    %883 = vmatprep.subr.bf16.mxu0 %v820
    %884 = vmatpush1.bf16.msra.mxu0 %v819
    %885 = vmatprep.subr.bf16.mxu0 %v822
    %886 = vmatpush1.bf16.msra.mxu0 %v821
    %887 = vmatprep.subr.bf16.mxu0 %v824
    %888 = vmatpush1.bf16.msra.mxu0 %v823
    %889 = vmatprep.subr.bf16.mxu0 %v826
    %890 = vmatpush1.bf16.msra.mxu0 %v825
    %891 = vmatprep.subr.bf16.mxu0 %v828
    %892 = vmatpush1.bf16.msra.mxu0 %v827
    %893 = vmatprep.mubr.bf16.mxu0 %v626
    %894 = vmatmul.mubr.bf16.gmra.mrb[0].mxu0 %v625
    %v895 = vpop.f32.mrb[0].mxu0
    %v896 = vadd.f32 %v694, %v895
    %v897 = vpop.f32.mrb[0].mxu0
    %v898 = vadd.f32 %v698, %v897
    %v899 = vpop.f32.mrb[0].mxu0
    %v900 = vadd.f32 %v694, %v899
    %v901 = vpop.f32.mrb[0].mxu0
    %v902 = vadd.f32 %v698, %v901
    %903 = vmatprep.mubr.bf16.mxu0 %v628
    %904 = vmatmul.mubr.bf16.gmra.mrb[0].mxu0 %v627
    %v905 = vpop.f32.mrb[0].mxu0
    %v906 = vadd.f32 %v694, %v905
    %v907 = vpop.f32.mrb[0].mxu0
    %v908 = vadd.f32 %v698, %v907
    %v909 = vpop.f32.mrb[0].mxu0
    %v910 = vadd.f32 %v694, %v909
    %v911 = vpop.f32.mrb[0].mxu0
    %v912 = vadd.f32 %v698, %v911
    %913 = vmatprep.mubr.bf16.mxu0 %v630
    %914 = vmatmul.mubr.bf16.gmra.mrb[0].mxu0 %v629
    %v915 = vpop.f32.mrb[0].mxu0
    %v916 = vadd.f32 %v694, %v915
    %v917 = vpop.f32.mrb[0].mxu0
    %v918 = vadd.f32 %v698, %v917
    %v919 = vpop.f32.mrb[0].mxu0
    %v920 = vadd.f32 %v694, %v919
    %v921 = vpop.f32.mrb[0].mxu0
    %v922 = vadd.f32 %v698, %v921
    %923 = vmatprep.mubr.bf16.mxu0 %v632
    %924 = vmatmul.mubr.bf16.gmra.mrb[0].mxu0 %v631
    %v925 = vpop.f32.mrb[0].mxu0
    %v926 = vadd.f32 %v694, %v925
    %v927 = vpop.f32.mrb[0].mxu0
    %v928 = vadd.f32 %v698, %v927
    %v929 = vpop.f32.mrb[0].mxu0
    %v930 = vadd.f32 %v694, %v929
    %v931 = vpop.f32.mrb[0].mxu0
    %v932 = vadd.f32 %v698, %v931
    %933 = vmatprep.mubr.bf16.mxu0 %v634
    %934 = vmatmul.mubr.bf16.gmra.mrb[0].mxu0 %v633
    %v935 = vpop.f32.mrb[0].mxu0
    %v936 = vadd.f32 %v694, %v935
    %v937 = vpop.f32.mrb[0].mxu0
    %v938 = vadd.f32 %v698, %v937
    %v939 = vpop.f32.mrb[0].mxu0
    %v940 = vadd.f32 %v694, %v939
    %v941 = vpop.f32.mrb[0].mxu0
    %v942 = vadd.f32 %v698, %v941
    %943 = vmatprep.mubr.bf16.mxu0 %v636
    %944 = vmatmul.mubr.bf16.gmra.mrb[0].mxu0 %v635
    %v945 = vpop.f32.mrb[0].mxu0
    %v946 = vadd.f32 %v694, %v945
    %v947 = vpop.f32.mrb[0].mxu0
    %v948 = vadd.f32 %v698, %v947
    %v949 = vpop.f32.mrb[0].mxu0
    %v950 = vadd.f32 %v694, %v949
    %v951 = vpop.f32.mrb[0].mxu0
    %v952 = vadd.f32 %v698, %v951
    %953 = vmatprep.mubr.bf16.mxu0 %v638
    %954 = vmatmul.mubr.bf16.gmra.mrb[0].mxu0 %v637
    %v955 = vpop.f32.mrb[0].mxu0
    %v956 = vadd.f32 %v694, %v955
    %v957 = vpop.f32.mrb[0].mxu0
    %v958 = vadd.f32 %v698, %v957
    %v959 = vpop.f32.mrb[0].mxu0
    %v960 = vadd.f32 %v694, %v959
    %v961 = vpop.f32.mrb[0].mxu0
    %v962 = vadd.f32 %v698, %v961
    %963 = vmatprep.mubr.bf16.mxu0 %v640
    %964 = vmatmul.mubr.bf16.gmra.mrb[0].mxu0 %v639
    %v965 = vpop.f32.mrb[0].mxu0
    %v966 = vadd.f32 %v694, %v965
    %v967 = vpop.f32.mrb[0].mxu0
    %v968 = vadd.f32 %v698, %v967
    %v969 = vpop.f32.mrb[0].mxu0
    %v970 = vadd.f32 %v694, %v969
    %v971 = vpop.f32.mrb[0].mxu0
    %v972 = vadd.f32 %v698, %v971
    %973 = vmatprep.mubr.bf16.mxu0 %v642
    %974 = vmatmul.mubr.bf16.gmra.mrb[0].mxu0 %v641
    %v975 = vpop.f32.mrb[0].mxu0
    %v976 = vadd.f32 %v694, %v975
    %v977 = vpop.f32.mrb[0].mxu0
    %v978 = vadd.f32 %v698, %v977
    %v979 = vpop.f32.mrb[0].mxu0
    %v980 = vadd.f32 %v694, %v979
    %v981 = vpop.f32.mrb[0].mxu0
    %v982 = vadd.f32 %v698, %v981
    %983 = vmatprep.mubr.bf16.mxu0 %v644
    %984 = vmatmul.mubr.bf16.gmra.mrb[0].mxu0 %v643
    %v985 = vpop.f32.mrb[0].mxu0
    %v986 = vadd.f32 %v694, %v985
    %v987 = vpop.f32.mrb[0].mxu0
    %v988 = vadd.f32 %v698, %v987
    %v989 = vpop.f32.mrb[0].mxu0
    %v990 = vadd.f32 %v694, %v989
    %v991 = vpop.f32.mrb[0].mxu0
    %v992 = vadd.f32 %v698, %v991
    %993 = vmatprep.mubr.bf16.mxu0 %v646
    %994 = vmatmul.mubr.bf16.gmra.mrb[0].mxu0 %v645
    %v995 = vpop.f32.mrb[0].mxu0
    %v996 = vadd.f32 %v694, %v995
    %v997 = vpop.f32.mrb[0].mxu0
    %v998 = vadd.f32 %v698, %v997
    %v999 = vpop.f32.mrb[0].mxu0
    %v1000 = vadd.f32 %v694, %v999
    %v1001 = vpop.f32.mrb[0].mxu0
    %v1002 = vadd.f32 %v698, %v1001
    %1003 = vmatprep.mubr.bf16.mxu0 %v648
    %1004 = vmatmul.mubr.bf16.gmra.mrb[0].mxu0 %v647
    %v1005 = vpop.f32.mrb[0].mxu0
    %v1006 = vadd.f32 %v694, %v1005
    %v1007 = vpop.f32.mrb[0].mxu0
    %v1008 = vadd.f32 %v698, %v1007
    %v1009 = vpop.f32.mrb[0].mxu0
    %v1010 = vadd.f32 %v694, %v1009
    %v1011 = vpop.f32.mrb[0].mxu0
    %v1012 = vadd.f32 %v698, %v1011
    %1013 = vmatprep.mubr.bf16.mxu0 %v650
    %1014 = vmatmul.mubr.bf16.gmra.mrb[0].mxu0 %v649
    %v1015 = vpop.f32.mrb[0].mxu0
    %v1016 = vadd.f32 %v694, %v1015
    %v1017 = vpop.f32.mrb[0].mxu0
    %v1018 = vadd.f32 %v698, %v1017
    %v1019 = vpop.f32.mrb[0].mxu0
    %v1020 = vadd.f32 %v694, %v1019
    %v1021 = vpop.f32.mrb[0].mxu0
    %v1022 = vadd.f32 %v698, %v1021
    %1023 = vmatprep.mubr.bf16.mxu0 %v652
    %1024 = vmatmul.mubr.bf16.gmra.mrb[0].mxu0 %v651
    %v1025 = vpop.f32.mrb[0].mxu0
    %v1026 = vadd.f32 %v694, %v1025
    %v1027 = vpop.f32.mrb[0].mxu0
    %v1028 = vadd.f32 %v698, %v1027
    %v1029 = vpop.f32.mrb[0].mxu0
    %v1030 = vadd.f32 %v694, %v1029
    %v1031 = vpop.f32.mrb[0].mxu0
    %v1032 = vadd.f32 %v698, %v1031
    %1033 = vmatprep.mubr.bf16.mxu0 %v654
    %1034 = vmatmul.mubr.bf16.gmra.mrb[0].mxu0 %v653
    %v1035 = vpop.f32.mrb[0].mxu0
    %v1036 = vadd.f32 %v694, %v1035
    %v1037 = vpop.f32.mrb[0].mxu0
    %v1038 = vadd.f32 %v698, %v1037
    %v1039 = vpop.f32.mrb[0].mxu0
    %v1040 = vadd.f32 %v694, %v1039
    %v1041 = vpop.f32.mrb[0].mxu0
    %v1042 = vadd.f32 %v698, %v1041
    %1043 = vmatprep.mubr.bf16.mxu0 %v656
    %1044 = vmatmul.mubr.bf16.gmra.mrb[0].mxu0 %v655
    %v1045 = vpop.f32.mrb[0].mxu0
    %v1046 = vadd.f32 %v694, %v1045
    %v1047 = vpop.f32.mrb[0].mxu0
    %v1048 = vadd.f32 %v698, %v1047
    %v1049 = vpop.f32.mrb[0].mxu0
    %v1050 = vadd.f32 %v694, %v1049
    %v1051 = vpop.f32.mrb[0].mxu0
    %v1052 = vadd.f32 %v698, %v1051
    %1053 = vdwg.mxu0
    %v1054 = vmax.f32 %v896, 0.0
    %v1055 = vmax.f32 %v898, 0.0
    %v1056 = vmax.f32 %v900, 0.0
    %v1057 = vmax.f32 %v902, 0.0
    %v1058 = vmax.f32 %v906, 0.0
    %v1059 = vmax.f32 %v908, 0.0
    %v1060 = vmax.f32 %v910, 0.0
    %v1061 = vmax.f32 %v912, 0.0
    %v1062 = vmax.f32 %v916, 0.0
    %v1063 = vmax.f32 %v918, 0.0
    %v1064 = vmax.f32 %v920, 0.0
    %v1065 = vmax.f32 %v922, 0.0
    %v1066 = vmax.f32 %v926, 0.0
    %v1067 = vmax.f32 %v928, 0.0
    %v1068 = vmax.f32 %v930, 0.0
    %v1069 = vmax.f32 %v932, 0.0
    %v1070 = vmax.f32 %v936, 0.0
    %v1071 = vmax.f32 %v938, 0.0
    %v1072 = vmax.f32 %v940, 0.0
    %v1073 = vmax.f32 %v942, 0.0
    %v1074 = vmax.f32 %v946, 0.0
    %v1075 = vmax.f32 %v948, 0.0
    %v1076 = vmax.f32 %v950, 0.0
    %v1077 = vmax.f32 %v952, 0.0
    %v1078 = vmax.f32 %v956, 0.0
    %v1079 = vmax.f32 %v958, 0.0
    %v1080 = vmax.f32 %v960, 0.0
    %v1081 = vmax.f32 %v962, 0.0
    %v1082 = vmax.f32 %v966, 0.0
    %v1083 = vmax.f32 %v968, 0.0
    %v1084 = vmax.f32 %v970, 0.0
    %v1085 = vmax.f32 %v972, 0.0
    %v1086 = vmax.f32 %v976, 0.0
    %v1087 = vmax.f32 %v978, 0.0
    %v1088 = vmax.f32 %v980, 0.0
    %v1089 = vmax.f32 %v982, 0.0
    %v1090 = vmax.f32 %v986, 0.0
    %v1091 = vmax.f32 %v988, 0.0
    %v1092 = vmax.f32 %v990, 0.0
    %v1093 = vmax.f32 %v992, 0.0
    %v1094 = vmax.f32 %v996, 0.0
    %v1095 = vmax.f32 %v998, 0.0
    %v1096 = vmax.f32 %v1000, 0.0
    %v1097 = vmax.f32 %v1002, 0.0
    %v1098 = vmax.f32 %v1006, 0.0
    %v1099 = vmax.f32 %v1008, 0.0
    %v1100 = vmax.f32 %v1010, 0.0
    %v1101 = vmax.f32 %v1012, 0.0
    %v1102 = vmax.f32 %v1016, 0.0
    %v1103 = vmax.f32 %v1018, 0.0
    %v1104 = vmax.f32 %v1020, 0.0
    %v1105 = vmax.f32 %v1022, 0.0
    %v1106 = vmax.f32 %v1026, 0.0
    %v1107 = vmax.f32 %v1028, 0.0
    %v1108 = vmax.f32 %v1030, 0.0
    %v1109 = vmax.f32 %v1032, 0.0
    %v1110 = vmax.f32 %v1036, 0.0
    %v1111 = vmax.f32 %v1038, 0.0
    %v1112 = vmax.f32 %v1040, 0.0
    %v1113 = vmax.f32 %v1042, 0.0
    %v1114 = vmax.f32 %v1046, 0.0
    %v1115 = vmax.f32 %v1048, 0.0
    %v1116 = vmax.f32 %v1050, 0.0
    %v1117 = vmax.f32 %v1052, 0.0
    %v1118 = vpack.c.bf16 %v1056, %v1054
    %v1119 = vpack.c.bf16 %v1057, %v1055
    %v1120 = vpack.c.bf16 %v1060, %v1058
    %v1121 = vpack.c.bf16 %v1061, %v1059
    %v1122 = vpack.c.bf16 %v1064, %v1062
    %v1123 = vpack.c.bf16 %v1065, %v1063
    %v1124 = vpack.c.bf16 %v1068, %v1066
    %v1125 = vpack.c.bf16 %v1069, %v1067
    %v1126 = vpack.c.bf16 %v1072, %v1070
    %v1127 = vpack.c.bf16 %v1073, %v1071
    %v1128 = vpack.c.bf16 %v1076, %v1074
    %v1129 = vpack.c.bf16 %v1077, %v1075
    %v1130 = vpack.c.bf16 %v1080, %v1078
    %v1131 = vpack.c.bf16 %v1081, %v1079
    %v1132 = vpack.c.bf16 %v1084, %v1082
    %v1133 = vpack.c.bf16 %v1085, %v1083
    %v1134 = vpack.c.bf16 %v1088, %v1086
    %v1135 = vpack.c.bf16 %v1089, %v1087
    %v1136 = vpack.c.bf16 %v1092, %v1090
    %v1137 = vpack.c.bf16 %v1093, %v1091
    %v1138 = vpack.c.bf16 %v1096, %v1094
    %v1139 = vpack.c.bf16 %v1097, %v1095
    %v1140 = vpack.c.bf16 %v1100, %v1098
    %v1141 = vpack.c.bf16 %v1101, %v1099
    %v1142 = vpack.c.bf16 %v1104, %v1102
    %v1143 = vpack.c.bf16 %v1105, %v1103
    %v1144 = vpack.c.bf16 %v1108, %v1106
    %v1145 = vpack.c.bf16 %v1109, %v1107
    %v1146 = vpack.c.bf16 %v1112, %v1110
    %v1147 = vpack.c.bf16 %v1113, %v1111
    %v1148 = vpack.c.bf16 %v1116, %v1114
    %v1149 = vpack.c.bf16 %v1117, %v1115
    %v1150 = vld [vmem:[%s5] sm:$0xf]
    %v1151 = vld [vmem:[%s5 + $0x4] sm:$0xf]
    %v1152 = vld [vmem:[%s5 + $0x8] sm:$0xf]
    %v1153 = vld [vmem:[%s5 + $0xc] sm:$0xf]
    %v1154 = vld [vmem:[%s5 + $0x10] sm:$0xf]
    %v1155 = vld [vmem:[%s5 + $0x14] sm:$0xf]
    %v1156 = vld [vmem:[%s5 + $0x18] sm:$0xf]
    %v1157 = vld [vmem:[%s5 + $0x1c] sm:$0xf]
    %v1158 = vld [vmem:[%s5 + $0x20] sm:$0xf]
    %v1159 = vld [vmem:[%s5 + $0x24] sm:$0xf]
    %v1160 = vld [vmem:[%s5 + $0x28] sm:$0xf]
    %v1161 = vld [vmem:[%s5 + $0x2c] sm:$0xf]
    %v1162 = vld [vmem:[%s5 + $0x30] sm:$0xf]
    %v1163 = vld [vmem:[%s5 + $0x34] sm:$0xf]
    %v1164 = vld [vmem:[%s5 + $0x38] sm:$0xf]
    %v1165 = vld [vmem:[%s5 + $0x3c] sm:$0xf]
    %v1166 = vld [vmem:[%s5 + $0x40] sm:$0xf]
    %v1167 = vld [vmem:[%s5 + $0x44] sm:$0xf]
    %v1168 = vld [vmem:[%s5 + $0x48] sm:$0xf]
    %v1169 = vld [vmem:[%s5 + $0x4c] sm:$0xf]
    %v1170 = vld [vmem:[%s5 + $0x50] sm:$0xf]
    %v1171 = vld [vmem:[%s5 + $0x54] sm:$0xf]
    %v1172 = vld [vmem:[%s5 + $0x58] sm:$0xf]
    %v1173 = vld [vmem:[%s5 + $0x5c] sm:$0xf]
    %v1174 = vld [vmem:[%s5 + $0x60] sm:$0xf]
    %v1175 = vld [vmem:[%s5 + $0x64] sm:$0xf]
    %v1176 = vld [vmem:[%s5 + $0x68] sm:$0xf]
    %v1177 = vld [vmem:[%s5 + $0x6c] sm:$0xf]
    %v1178 = vld [vmem:[%s5 + $0x70] sm:$0xf]
    %v1179 = vld [vmem:[%s5 + $0x74] sm:$0xf]
    %v1180 = vld [vmem:[%s5 + $0x78] sm:$0xf]
    %v1181 = vld [vmem:[%s5 + $0x7c] sm:$0xf]
    %v1182 = vld [vmem:[%s6] sm:$0x1]
    %v1184 = vlaneseq
    %v1185 = vshrl.u32 %v1184, 7
    %v1186 = vsub.s32 0, %v1185
    %v1187 = vrot.slane %v1182, %v1186
    %v1221 = vunpack.c.l.b16 %v1150
    %v1222 = vunpack.c.l.b16 %v1151
    %v1223 = vunpack.c.l.b16 %v1152
    %v1224 = vunpack.c.l.b16 %v1153
    %v1225 = vunpack.c.l.b16 %v1154
    %v1226 = vunpack.c.l.b16 %v1155
    %v1227 = vunpack.c.l.b16 %v1156
    %v1228 = vunpack.c.l.b16 %v1157
    %v1229 = vunpack.c.l.b16 %v1158
    %v1230 = vunpack.c.l.b16 %v1159
    %v1231 = vunpack.c.l.b16 %v1160
    %v1232 = vunpack.c.l.b16 %v1161
    %v1233 = vunpack.c.l.b16 %v1162
    %v1234 = vunpack.c.l.b16 %v1163
    %v1235 = vunpack.c.l.b16 %v1164
    %v1236 = vunpack.c.l.b16 %v1165
    %v1237 = vunpack.c.l.b16 %v1166
    %v1238 = vunpack.c.l.b16 %v1167
    %v1239 = vunpack.c.l.b16 %v1168
    %v1240 = vunpack.c.l.b16 %v1169
    %v1241 = vunpack.c.l.b16 %v1170
    %v1242 = vunpack.c.l.b16 %v1171
    %v1243 = vunpack.c.l.b16 %v1172
    %v1244 = vunpack.c.l.b16 %v1173
    %v1245 = vunpack.c.l.b16 %v1174
    %v1246 = vunpack.c.l.b16 %v1175
    %v1247 = vunpack.c.l.b16 %v1176
    %v1248 = vunpack.c.l.b16 %v1177
    %v1249 = vunpack.c.l.b16 %v1178
    %v1250 = vunpack.c.l.b16 %v1179
    %v1251 = vunpack.c.l.b16 %v1180
    %v1252 = vunpack.c.l.b16 %v1181
    %v1253 = vpack.c.b16 %v1222, %v1221
    %v1254 = vpack.c.b16 %v1224, %v1223
    %v1255 = vpack.c.b16 %v1226, %v1225
    %v1256 = vpack.c.b16 %v1228, %v1227
    %v1257 = vpack.c.b16 %v1230, %v1229
    %v1258 = vpack.c.b16 %v1232, %v1231
    %v1259 = vpack.c.b16 %v1234, %v1233
    %v1260 = vpack.c.b16 %v1236, %v1235
    %v1261 = vpack.c.b16 %v1238, %v1237
    %v1262 = vpack.c.b16 %v1240, %v1239
    %v1263 = vpack.c.b16 %v1242, %v1241
    %v1264 = vpack.c.b16 %v1244, %v1243
    %v1265 = vpack.c.b16 %v1246, %v1245
    %v1266 = vpack.c.b16 %v1248, %v1247
    %v1267 = vpack.c.b16 %v1250, %v1249
    %v1268 = vpack.c.b16 %v1252, %v1251
    %1285 = vmatprep.subr.bf16.mxu0 0
    %1286 = vmatpush1.bf16.msra.mxu0 %v1253
    %1287 = vmatprep.subr.bf16.mxu0 0
    %1288 = vmatpush1.bf16.msra.mxu0 %v1254
    %1289 = vmatprep.subr.bf16.mxu0 0
    %1290 = vmatpush1.bf16.msra.mxu0 %v1255
    %1291 = vmatprep.subr.bf16.mxu0 0
    %1292 = vmatpush1.bf16.msra.mxu0 %v1256
    %1293 = vmatprep.subr.bf16.mxu0 0
    %1294 = vmatpush1.bf16.msra.mxu0 %v1257
    %1295 = vmatprep.subr.bf16.mxu0 0
    %1296 = vmatpush1.bf16.msra.mxu0 %v1258
    %1297 = vmatprep.subr.bf16.mxu0 0
    %1298 = vmatpush1.bf16.msra.mxu0 %v1259
    %1299 = vmatprep.subr.bf16.mxu0 0
    %1300 = vmatpush1.bf16.msra.mxu0 %v1260
    %1301 = vmatprep.subr.bf16.mxu0 0
    %1302 = vmatpush1.bf16.msra.mxu0 %v1261
    %1303 = vmatprep.subr.bf16.mxu0 0
    %1304 = vmatpush1.bf16.msra.mxu0 %v1262
    %1305 = vmatprep.subr.bf16.mxu0 0
    %1306 = vmatpush1.bf16.msra.mxu0 %v1263
    %1307 = vmatprep.subr.bf16.mxu0 0
    %1308 = vmatpush1.bf16.msra.mxu0 %v1264
    %1309 = vmatprep.subr.bf16.mxu0 0
    %1310 = vmatpush1.bf16.msra.mxu0 %v1265
    %1311 = vmatprep.subr.bf16.mxu0 0
    %1312 = vmatpush1.bf16.msra.mxu0 %v1266
    %1313 = vmatprep.subr.bf16.mxu0 0
    %1314 = vmatpush1.bf16.msra.mxu0 %v1267
    %1315 = vmatprep.subr.bf16.mxu0 0
    %1316 = vmatpush1.bf16.msra.mxu0 %v1268
    %1317 = vmatprep.mubr.bf16.mxu0 %v1119
    %1318 = vmatmul.mubr.bf16.gmra.mrb[0].mxu0 %v1118
    %v1319 = vpop.f32.mrb[0].mxu0
    %v1320 = vadd.f32 %v1187, %v1319
    %v1321 = vpop.f32.mrb[0].mxu0
    %v1322 = vpop.f32.mrb[0].mxu0
    %v1323 = vadd.f32 %v1187, %v1322
    %v1324 = vpop.f32.mrb[0].mxu0
    %1325 = vmatprep.mubr.bf16.mxu0 %v1121
    %1326 = vmatmul.mubr.bf16.gmra.mrb[0].mxu0 %v1120
    %v1327 = vpop.f32.mrb[0].mxu0
    %v1328 = vadd.f32 %v1187, %v1327
    %v1329 = vpop.f32.mrb[0].mxu0
    %v1330 = vpop.f32.mrb[0].mxu0
    %v1331 = vadd.f32 %v1187, %v1330
    %v1332 = vpop.f32.mrb[0].mxu0
    %1333 = vmatprep.mubr.bf16.mxu0 %v1123
    %1334 = vmatmul.mubr.bf16.gmra.mrb[0].mxu0 %v1122
    %v1335 = vpop.f32.mrb[0].mxu0
    %v1336 = vadd.f32 %v1187, %v1335
    %v1337 = vpop.f32.mrb[0].mxu0
    %v1338 = vpop.f32.mrb[0].mxu0
    %v1339 = vadd.f32 %v1187, %v1338
    %v1340 = vpop.f32.mrb[0].mxu0
    %1341 = vmatprep.mubr.bf16.mxu0 %v1125
    %1342 = vmatmul.mubr.bf16.gmra.mrb[0].mxu0 %v1124
    %v1343 = vpop.f32.mrb[0].mxu0
    %v1344 = vadd.f32 %v1187, %v1343
    %v1345 = vpop.f32.mrb[0].mxu0
    %v1346 = vpop.f32.mrb[0].mxu0
    %v1347 = vadd.f32 %v1187, %v1346
    %v1348 = vpop.f32.mrb[0].mxu0
    %1349 = vmatprep.mubr.bf16.mxu0 %v1127
    %1350 = vmatmul.mubr.bf16.gmra.mrb[0].mxu0 %v1126
    %v1351 = vpop.f32.mrb[0].mxu0
    %v1352 = vadd.f32 %v1187, %v1351
    %v1353 = vpop.f32.mrb[0].mxu0
    %v1354 = vpop.f32.mrb[0].mxu0
    %v1355 = vadd.f32 %v1187, %v1354
    %v1356 = vpop.f32.mrb[0].mxu0
    %1357 = vmatprep.mubr.bf16.mxu0 %v1129
    %1358 = vmatmul.mubr.bf16.gmra.mrb[0].mxu0 %v1128
    %v1359 = vpop.f32.mrb[0].mxu0
    %v1360 = vadd.f32 %v1187, %v1359
    %v1361 = vpop.f32.mrb[0].mxu0
    %v1362 = vpop.f32.mrb[0].mxu0
    %v1363 = vadd.f32 %v1187, %v1362
    %v1364 = vpop.f32.mrb[0].mxu0
    %1365 = vmatprep.mubr.bf16.mxu0 %v1131
    %1366 = vmatmul.mubr.bf16.gmra.mrb[0].mxu0 %v1130
    %v1367 = vpop.f32.mrb[0].mxu0
    %v1368 = vadd.f32 %v1187, %v1367
    %v1369 = vpop.f32.mrb[0].mxu0
    %v1370 = vpop.f32.mrb[0].mxu0
    %v1371 = vadd.f32 %v1187, %v1370
    %v1372 = vpop.f32.mrb[0].mxu0
    %1373 = vmatprep.mubr.bf16.mxu0 %v1133
    %1374 = vmatmul.mubr.bf16.gmra.mrb[0].mxu0 %v1132
    %v1375 = vpop.f32.mrb[0].mxu0
    %v1376 = vadd.f32 %v1187, %v1375
    %v1377 = vpop.f32.mrb[0].mxu0
    %v1378 = vpop.f32.mrb[0].mxu0
    %v1379 = vadd.f32 %v1187, %v1378
    %v1380 = vpop.f32.mrb[0].mxu0
    %1381 = vmatprep.mubr.bf16.mxu0 %v1135
    %1382 = vmatmul.mubr.bf16.gmra.mrb[0].mxu0 %v1134
    %v1383 = vpop.f32.mrb[0].mxu0
    %v1384 = vadd.f32 %v1187, %v1383
    %v1385 = vpop.f32.mrb[0].mxu0
    %v1386 = vpop.f32.mrb[0].mxu0
    %v1387 = vadd.f32 %v1187, %v1386
    %v1388 = vpop.f32.mrb[0].mxu0
    %1389 = vmatprep.mubr.bf16.mxu0 %v1137
    %1390 = vmatmul.mubr.bf16.gmra.mrb[0].mxu0 %v1136
    %v1391 = vpop.f32.mrb[0].mxu0
    %v1392 = vadd.f32 %v1187, %v1391
    %v1393 = vpop.f32.mrb[0].mxu0
    %v1394 = vpop.f32.mrb[0].mxu0
    %v1395 = vadd.f32 %v1187, %v1394
    %v1396 = vpop.f32.mrb[0].mxu0
    %1397 = vmatprep.mubr.bf16.mxu0 %v1139
    %1398 = vmatmul.mubr.bf16.gmra.mrb[0].mxu0 %v1138
    %v1399 = vpop.f32.mrb[0].mxu0
    %v1400 = vadd.f32 %v1187, %v1399
    %v1401 = vpop.f32.mrb[0].mxu0
    %v1402 = vpop.f32.mrb[0].mxu0
    %v1403 = vadd.f32 %v1187, %v1402
    %v1404 = vpop.f32.mrb[0].mxu0
    %1405 = vmatprep.mubr.bf16.mxu0 %v1141
    %1406 = vmatmul.mubr.bf16.gmra.mrb[0].mxu0 %v1140
    %v1407 = vpop.f32.mrb[0].mxu0
    %v1408 = vadd.f32 %v1187, %v1407
    %v1409 = vpop.f32.mrb[0].mxu0
    %v1410 = vpop.f32.mrb[0].mxu0
    %v1411 = vadd.f32 %v1187, %v1410
    %v1412 = vpop.f32.mrb[0].mxu0
    %1413 = vmatprep.mubr.bf16.mxu0 %v1143
    %1414 = vmatmul.mubr.bf16.gmra.mrb[0].mxu0 %v1142
    %v1415 = vpop.f32.mrb[0].mxu0
    %v1416 = vadd.f32 %v1187, %v1415
    %v1417 = vpop.f32.mrb[0].mxu0
    %v1418 = vpop.f32.mrb[0].mxu0
    %v1419 = vadd.f32 %v1187, %v1418
    %v1420 = vpop.f32.mrb[0].mxu0
    %1421 = vmatprep.mubr.bf16.mxu0 %v1145
    %1422 = vmatmul.mubr.bf16.gmra.mrb[0].mxu0 %v1144
    %v1423 = vpop.f32.mrb[0].mxu0
    %v1424 = vadd.f32 %v1187, %v1423
    %v1425 = vpop.f32.mrb[0].mxu0
    %v1426 = vpop.f32.mrb[0].mxu0
    %v1427 = vadd.f32 %v1187, %v1426
    %v1428 = vpop.f32.mrb[0].mxu0
    %1429 = vmatprep.mubr.bf16.mxu0 %v1147
    %1430 = vmatmul.mubr.bf16.gmra.mrb[0].mxu0 %v1146
    %v1431 = vpop.f32.mrb[0].mxu0
    %v1432 = vadd.f32 %v1187, %v1431
    %v1433 = vpop.f32.mrb[0].mxu0
    %v1434 = vpop.f32.mrb[0].mxu0
    %v1435 = vadd.f32 %v1187, %v1434
    %v1436 = vpop.f32.mrb[0].mxu0
    %1437 = vmatprep.mubr.bf16.mxu0 %v1149
    %1438 = vmatmul.mubr.bf16.gmra.mrb[0].mxu0 %v1148
    %v1439 = vpop.f32.mrb[0].mxu0
    %v1440 = vadd.f32 %v1187, %v1439
    %v1441 = vpop.f32.mrb[0].mxu0
    %v1442 = vpop.f32.mrb[0].mxu0
    %v1443 = vadd.f32 %v1187, %v1442
    %v1444 = vpop.f32.mrb[0].mxu0
    %1445 = vdwg.mxu0
    %vm1446 = vcmask 523264
    %1447 = vst.msk [vmem:[%s7] sm:$0xff] %vm1446, %v1320
    %1448 = vst.msk [vmem:[%s7 + $0x8] sm:$0xff] %vm1446, %v1323
    %1449 = vst.msk [vmem:[%s7 + $0x10] sm:$0xff] %vm1446, %v1328
    %1450 = vst.msk [vmem:[%s7 + $0x18] sm:$0xff] %vm1446, %v1331
    %1451 = vst.msk [vmem:[%s7 + $0x20] sm:$0xff] %vm1446, %v1336
    %1452 = vst.msk [vmem:[%s7 + $0x28] sm:$0xff] %vm1446, %v1339
    %1453 = vst.msk [vmem:[%s7 + $0x30] sm:$0xff] %vm1446, %v1344
    %1454 = vst.msk [vmem:[%s7 + $0x38] sm:$0xff] %vm1446, %v1347
    %1455 = vst.msk [vmem:[%s7 + $0x40] sm:$0xff] %vm1446, %v1352
    %1456 = vst.msk [vmem:[%s7 + $0x48] sm:$0xff] %vm1446, %v1355
    %1457 = vst.msk [vmem:[%s7 + $0x50] sm:$0xff] %vm1446, %v1360
    %1458 = vst.msk [vmem:[%s7 + $0x58] sm:$0xff] %vm1446, %v1363
    %1459 = vst.msk [vmem:[%s7 + $0x60] sm:$0xff] %vm1446, %v1368
    %1460 = vst.msk [vmem:[%s7 + $0x68] sm:$0xff] %vm1446, %v1371
    %1461 = vst.msk [vmem:[%s7 + $0x70] sm:$0xff] %vm1446, %v1376
    %1462 = vst.msk [vmem:[%s7 + $0x78] sm:$0xff] %vm1446, %v1379
    %1463 = vst.msk [vmem:[%s7 + $0x80] sm:$0xff] %vm1446, %v1384
    %1464 = vst.msk [vmem:[%s7 + $0x88] sm:$0xff] %vm1446, %v1387
    %1465 = vst.msk [vmem:[%s7 + $0x90] sm:$0xff] %vm1446, %v1392
    %1466 = vst.msk [vmem:[%s7 + $0x98] sm:$0xff] %vm1446, %v1395
    %1467 = vst.msk [vmem:[%s7 + $0xa0] sm:$0xff] %vm1446, %v1400
    %1468 = vst.msk [vmem:[%s7 + $0xa8] sm:$0xff] %vm1446, %v1403
    %1469 = vst.msk [vmem:[%s7 + $0xb0] sm:$0xff] %vm1446, %v1408
    %1470 = vst.msk [vmem:[%s7 + $0xb8] sm:$0xff] %vm1446, %v1411
    %1471 = vst.msk [vmem:[%s7 + $0xc0] sm:$0xff] %vm1446, %v1416
    %1472 = vst.msk [vmem:[%s7 + $0xc8] sm:$0xff] %vm1446, %v1419
    %1473 = vst.msk [vmem:[%s7 + $0xd0] sm:$0xff] %vm1446, %v1424
    %1474 = vst.msk [vmem:[%s7 + $0xd8] sm:$0xff] %vm1446, %v1427
    %1475 = vst.msk [vmem:[%s7 + $0xe0] sm:$0xff] %vm1446, %v1432
    %1476 = vst.msk [vmem:[%s7 + $0xe8] sm:$0xff] %vm1446, %v1435
    %1477 = vst.msk [vmem:[%s7 + $0xf0] sm:$0xff] %vm1446, %v1440
    %1478 = vst.msk [vmem:[%s7 + $0xf8] sm:$0xff] %vm1446, %v1443
    // Predicated region
    $region42: #{tpu_custom_call.1} parent=1 // pred_check
      _
    $region43: #{tpu_custom_call.1} parent=1 // pred_check_branch
      %1480 = sbr.rel (0) target = $region45
    $region44: #{tpu_custom_call.1} parent=1 // pred_region
      _
    $region45: #{tpu_custom_call.1} parent=1 // pred_fallthru
      _
    // Predicated region
    $region46: #{tpu_custom_call.1} parent=1 // pred_check
      _
    $region47: #{tpu_custom_call.1} parent=1 // pred_check_branch
      %1482 = sbr.rel (0) target = $region49
    $region48: #{tpu_custom_call.1} parent=1 // pred_region
      _
    $region49: #{tpu_custom_call.1} parent=1 // pred_fallthru
      _
    %1483 = vsyncpa [#allocation3], 1
    %1484 = vsyncpa [#allocation5], 1

</llo_original>
